<compile_context>
chip_gen: v5e
topology: v5e:2x2
jax: 0.10.0
libtpu: 0.0.40
codegen_flags: <defaults>
</compile_context>

<pallas_src>
import functools
from math import sqrt

import jax
import jax.numpy as jnp
from jax.experimental import pallas as pl
from jax.experimental.pallas import tpu as pltpu


def _pick_tile(dim: int, target: int) -> int:
    """Largest tile <= target that divides `dim` and is sublane-aligned (x8).
    Falls back to the full dimension (always a legal block shape)."""
    if dim <= target:
        return dim
    for t in range(target, 7, -1):
        if dim % t == 0 and t % 8 == 0:
            return t
    return dim


# ---------------------------------------------------------------------------
# Fused attention-layer kernel: grid = (batch, L tiles, KV tiles)
# ---------------------------------------------------------------------------
def _mha_flash_kernel(q_ref, k_ref, v_ref,
                      wq_ref, bq_ref, wk_ref, bk_ref, wv_ref, bv_ref,
                      wo_ref, bo_ref,
                      o_ref,
                      qp_ref, m_ref, l_ref, acc_ref,
                      *, n_heads, d_k, d_v, scale):
    # Ref shapes (batch dim squeezed by the BlockSpecs):
    #   q_ref: (tq, d_model) bf16      k_ref / v_ref: (tk, d_model) bf16
    #   wq/wk: (d_model, H*d_k) bf16   wv: (d_model, H*d_v) bf16
    #   wo   : (H*d_v, d_model) bf16   biases: f32 (1, D)
    #   o_ref: (tq, d_model)
    #   scratch: qp (tq, H*d_k) bf16, m/l (H, tq, 1) f32, acc (H, tq, d_v) f32
    f32, bf16 = jnp.float32, jnp.bfloat16
    H = n_heads
    kv = pl.program_id(2)

    @pl.when(kv == 0)
    def _init():
        # Q projection once per (batch, L-tile); softmax scale applied in f32.
        q = jnp.dot(q_ref[...], wq_ref[...], preferred_element_type=f32) + bq_ref[...]
        qp_ref[...] = (q * scale).astype(bf16)
        m_ref[...] = jnp.full(m_ref.shape, -jnp.inf, m_ref.dtype)
        l_ref[...] = jnp.zeros(l_ref.shape, l_ref.dtype)
        acc_ref[...] = jnp.zeros(acc_ref.shape, acc_ref.dtype)

    # K / V projections for this KV tile (bf16 MXU inputs, f32 accumulation).
    k = (jnp.dot(k_ref[...], wk_ref[...], preferred_element_type=f32)
         + bk_ref[...]).astype(bf16)                                  # (tk, H*d_k)
    v = (jnp.dot(v_ref[...], wv_ref[...], preferred_element_type=f32)
         + bv_ref[...]).astype(bf16)                                  # (tk, H*d_v)
    qp = qp_ref[...]                                                  # (tq, H*d_k)

    # Batch heads into single dot_generals (head = leading batch dim) so the
    # attention core is 2 batched matmuls + 1 batched softmax, not H small ones.
    qh = jnp.stack([qp[:, h * d_k:(h + 1) * d_k] for h in range(H)], axis=0)
    kh = jnp.stack([k[:, h * d_k:(h + 1) * d_k] for h in range(H)], axis=0)
    vh = jnp.stack([v[:, h * d_v:(h + 1) * d_v] for h in range(H)], axis=0)

    s = jnp.einsum('hqe,hke->hqk', qh, kh,
                   preferred_element_type=f32)                        # (H, tq, tk)

    # Online softmax update across KV tiles.
    m_prev = m_ref[...]
    m_new = jnp.maximum(m_prev, jnp.max(s, axis=-1, keepdims=True))
    alpha = jnp.exp(m_prev - m_new)
    p = jnp.exp(s - m_new)
    l_ref[...] = alpha * l_ref[...] + jnp.sum(p, axis=-1, keepdims=True)
    pv = jnp.einsum('hqk,hkd->hqd', p.astype(bf16), vh,
                    preferred_element_type=f32)                       # (H, tq, d_v)
    acc_ref[...] = alpha * acc_ref[...] + pv
    m_ref[...] = m_new

    @pl.when(kv == pl.num_programs(2) - 1)
    def _finalize():
        ctx3 = acc_ref[...] * pl.reciprocal(l_ref[...], approx=True)  # (H, tq, d_v)
        # Single lane-dense (tq, H*d_v) context -> fused output projection ->
        # one full-block output store.
        ctx = jnp.concatenate([ctx3[h] for h in range(H)], axis=-1).astype(bf16)
        out = jnp.dot(ctx, wo_ref[...], preferred_element_type=f32) + bo_ref[...]
        o_ref[...] = out.astype(o_ref.dtype)


def attention_layer(queries, keys, values, kparams, n_heads,
                    *, tq_target=256, tk_target=512):
    """queries: (B, L, d_model); keys/values: (B, S, d_model) -> (B, L, d_model)."""
    B, L, d_model = queries.shape
    _, S, _ = keys.shape
    d_k, d_v = kparams["d_k"], kparams["d_v"]
    Dk, Dv = n_heads * d_k, n_heads * d_v
    out_dtype = queries.dtype
    scale = 1.0 / sqrt(d_k)

    tq = _pick_tile(L, tq_target)
    tk = _pick_tile(S, tk_target)
    grid = (B, pl.cdiv(L, tq), pl.cdiv(S, tk))

    # Cast activations once in the wrapper: halves HBM->VMEM DMA bytes.
    qx = queries.astype(jnp.bfloat16)
    kx = keys.astype(jnp.bfloat16)
    vx = values.astype(jnp.bfloat16)

    kernel = functools.partial(_mha_flash_kernel,
                               n_heads=n_heads, d_k=d_k, d_v=d_v, scale=scale)
    resident = lambda b, l, s: (0, 0)   # weights: same block every grid step

    # Advisory cost estimate for XLA scheduling around the fused custom call.
    flops = 2 * B * (L * d_model * Dk + S * d_model * Dk + S * d_model * Dv
                     + n_heads * L * S * d_k + n_heads * L * S * d_v
                     + L * Dv * d_model)
    bytes_accessed = (2 * B * (L + 2 * S) * d_model            # bf16 activations in
                      + 4 * B * L * d_model                    # f32 output
                      + 2 * (2 * d_model * Dk + d_model * Dv + Dv * d_model)
                      + 4 * (2 * Dk + Dv + d_model))
    cost = pl.CostEstimate(flops=flops, transcendentals=B * n_heads * L * S,
                           bytes_accessed=bytes_accessed)

    # Explicit scoped-VMEM budget derived from the tile sizes (double-buffered
    # activation blocks + resident weights + scratch + softmax temporaries).
    w_bytes = (2 * (2 * d_model * Dk + d_model * Dv + Dv * d_model)
               + 4 * (2 * Dk + Dv + d_model))
    act_in = 2 * 2 * (tq + 2 * tk) * d_model
    act_out = 2 * 4 * tq * d_model
    scratch = 2 * tq * Dk + 4 * n_heads * tq * (2 * 128 + max(d_v, 128))
    temps = 4 * n_heads * tq * max(tk, 128) * 3
    vmem_est = 2 * w_bytes + act_in + act_out + scratch + temps
    vmem_limit = int(min(max(2 * vmem_est, 32 * 1024 * 1024), 64 * 1024 * 1024))

    return pl.pallas_call(
        kernel,
        out_shape=jax.ShapeDtypeStruct((B, L, d_model), out_dtype),
        grid=grid,
        in_specs=[
            pl.BlockSpec((None, tq, d_model), lambda b, l, s: (b, l, 0)),
            pl.BlockSpec((None, tk, d_model), lambda b, l, s: (b, s, 0)),
            pl.BlockSpec((None, tk, d_model), lambda b, l, s: (b, s, 0)),
            pl.BlockSpec((d_model, Dk), resident),   # wq^T
            pl.BlockSpec((1, Dk), resident),         # bq
            pl.BlockSpec((d_model, Dk), resident),   # wk^T
            pl.BlockSpec((1, Dk), resident),         # bk
            pl.BlockSpec((d_model, Dv), resident),   # wv^T
            pl.BlockSpec((1, Dv), resident),         # bv
            pl.BlockSpec((Dv, d_model), resident),   # wo^T
            pl.BlockSpec((1, d_model), resident),    # bo
        ],
        out_specs=pl.BlockSpec((None, tq, d_model), lambda b, l, s: (b, l, 0)),
        scratch_shapes=[
            pltpu.VMEM((tq, Dk), jnp.bfloat16),              # projected + scaled q
            pltpu.VMEM((n_heads, tq, 1), jnp.float32),       # running max
            pltpu.VMEM((n_heads, tq, 1), jnp.float32),       # running denom
            pltpu.VMEM((n_heads, tq, d_v), jnp.float32),     # running PV accumulator
        ],
        compiler_params=pltpu.CompilerParams(
            dimension_semantics=("parallel", "parallel", "arbitrary"),
            vmem_limit_bytes=vmem_limit),
        cost_estimate=cost,
    )(qx, kx, vx,
      kparams["wq_t"], kparams["bq"], kparams["wk_t"], kparams["bk"],
      kparams["wv_t"], kparams["bv"], kparams["wo_t"], kparams["bo"])


# ---------------------------------------------------------------------------
# One-time parameter preparation (outside the kernel, reused every call):
#  - transpose torch-style (out, in) weights to (in, out)
#  - cast matmul operands to bf16 (biases stay f32)
# ---------------------------------------------------------------------------
def prepare_params(params, n_heads, mxu_dtype=jnp.bfloat16):
    d_k = params["wq"].shape[0] // n_heads
    d_v = params["wv"].shape[0] // n_heads
    return dict(
        wq_t=params["wq"].T.astype(mxu_dtype),
        bq=params["bq"].reshape(1, -1).astype(jnp.float32),
        wk_t=params["wk"].T.astype(mxu_dtype),
        bk=params["bk"].reshape(1, -1).astype(jnp.float32),
        wv_t=params["wv"].T.astype(mxu_dtype),
        bv=params["bv"].reshape(1, -1).astype(jnp.float32),
        wo_t=params["wo"].T.astype(mxu_dtype),
        bo=params["bo"].reshape(1, -1).astype(jnp.float32),
        d_k=d_k,
        d_v=d_v,
    )


# ---------------------------------------------------------------------------
# Pure-JAX f32 reference (mirrors the PyTorch module semantics, eval mode)
# ---------------------------------------------------------------------------
def attention_layer_ref(queries, keys, values, params, n_heads):
    B, L, d_model = queries.shape
    _, S, _ = keys.shape
    H = n_heads
    d_k = params["wq"].shape[0] // H
    d_v = params["wv"].shape[0] // H
    q = (queries @ params["wq"].T + params["bq"]).reshape(B, L, H, d_k)
    k = (keys @ params["wk"].T + params["bk"]).reshape(B, S, H, d_k)
    v = (values @ params["wv"].T + params["bv"]).reshape(B, S, H, d_v)
    scale = 1.0 / sqrt(d_k)
    scores = jnp.einsum("blhe,bshe->bhls", q, k) * scale
    a = jax.nn.softmax(scores, axis=-1)
    out = jnp.einsum("bhls,bshd->blhd", a, v).reshape(B, L, H * d_v)
    return out @ params["wo"].T + params["bo"]


def init_params(key, d_model, n_heads):
    d_k = d_model // n_heads
    d_v = d_model // n_heads
    ks = jax.random.split(key, 8)

    def lin(kw, kb, out_f, in_f):
        bound = 1.0 / sqrt(in_f)
        w = jax.random.uniform(kw, (out_f, in_f), jnp.float32, -bound, bound)
        b = jax.random.uniform(kb, (out_f,), jnp.float32, -bound, bound)
        return w, b

    wq, bq = lin(ks[0], ks[1], d_k * n_heads, d_model)
    wk, bk = lin(ks[2], ks[3], d_k * n_heads, d_model)
    wv, bv = lin(ks[4], ks[5], d_v * n_heads, d_model)
    wo, bo = lin(ks[6], ks[7], d_model, d_v * n_heads)
    return dict(wq=wq, bq=bq, wk=wk, bk=bk, wv=wv, bv=bv, wo=wo, bo=bo)


if __name__ == "__main__":
    B, L, S, d_model, n_heads = 2, 8, 8, 32, 4

    key = jax.random.PRNGKey(0)
    kq, kk, kv, kp = jax.random.split(key, 4)
    queries = jax.random.normal(kq, (B, L, d_model), jnp.float32)
    keys_in = jax.random.normal(kk, (B, S, d_model), jnp.float32)
    values = jax.random.normal(kv, (B, S, d_model), jnp.float32)
    params = init_params(kp, d_model, n_heads)

    kparams = prepare_params(params, n_heads)
    out = attention_layer(queries, keys_in, values, kparams, n_heads)
    out = jax.block_until_ready(out)

    ref = attention_layer_ref(queries, keys_in, values, params, n_heads)
    assert out.shape == (B, L, d_model)
    # bf16 activations/weights + approx reciprocal -> looser tolerance than f32.
    assert jnp.allclose(out, ref, atol=5e-2, rtol=5e-2), "mismatch vs reference"
    print("KERNEL_OK")
</pallas_src>

<mosaic_0001>
module attributes {stable_mosaic.version = 11 : i64} {
  func.func @_mha_flash_kernel(%arg0: i32, %arg1: i32, %arg2: i32, %arg3: memref<1x8x32xbf16, #tpu.memory_space<vmem>>, %arg4: memref<1x8x32xbf16, #tpu.memory_space<vmem>>, %arg5: memref<1x8x32xbf16, #tpu.memory_space<vmem>>, %arg6: memref<32x32xbf16, #tpu.memory_space<vmem>>, %arg7: memref<1x32xf32, #tpu.memory_space<vmem>>, %arg8: memref<32x32xbf16, #tpu.memory_space<vmem>>, %arg9: memref<1x32xf32, #tpu.memory_space<vmem>>, %arg10: memref<32x32xbf16, #tpu.memory_space<vmem>>, %arg11: memref<1x32xf32, #tpu.memory_space<vmem>>, %arg12: memref<32x32xbf16, #tpu.memory_space<vmem>>, %arg13: memref<1x32xf32, #tpu.memory_space<vmem>>, %arg14: memref<1x8x32xf32, #tpu.memory_space<vmem>>, %arg15: memref<8x32xbf16, #tpu.memory_space<vmem>>, %arg16: memref<4x8x1xf32, #tpu.memory_space<vmem>>, %arg17: memref<4x8x1xf32, #tpu.memory_space<vmem>>, %arg18: memref<4x8x8xf32, #tpu.memory_space<vmem>>) attributes {dimension_semantics = [#tpu.dimension_semantics<parallel>, #tpu.dimension_semantics<parallel>, #tpu.dimension_semantics<arbitrary>], iteration_bounds = array<i64: 2, 1, 1>, scalar_prefetch = 0 : i64, scratch_operands = 4 : i64, tpu.core_type = #tpu.core_type<tc>, window_params = [{transform_indices = @transform_0, window_bounds = array<i64: 1, 8, 32>}, {transform_indices = @transform_1, window_bounds = array<i64: 1, 8, 32>}, {transform_indices = @transform_2, window_bounds = array<i64: 1, 8, 32>}, {pipeline_mode = #tpu.pipeline_mode<synchronous>, transform_indices = @transform_3, window_bounds = array<i64: 32, 32>}, {pipeline_mode = #tpu.pipeline_mode<synchronous>, transform_indices = @transform_4, window_bounds = array<i64: 1, 32>}, {pipeline_mode = #tpu.pipeline_mode<synchronous>, transform_indices = @transform_5, window_bounds = array<i64: 32, 32>}, {pipeline_mode = #tpu.pipeline_mode<synchronous>, transform_indices = @transform_6, window_bounds = array<i64: 1, 32>}, {pipeline_mode = #tpu.pipeline_mode<synchronous>, transform_indices = @transform_7, window_bounds = array<i64: 32, 32>}, {pipeline_mode = #tpu.pipeline_mode<synchronous>, transform_indices = @transform_8, window_bounds = array<i64: 1, 32>}, {pipeline_mode = #tpu.pipeline_mode<synchronous>, transform_indices = @transform_9, window_bounds = array<i64: 32, 32>}, {pipeline_mode = #tpu.pipeline_mode<synchronous>, transform_indices = @transform_10, window_bounds = array<i64: 1, 32>}, {transform_indices = @transform_11, window_bounds = array<i64: 1, 8, 32>}]} {
    %c0_i32 = arith.constant 0 : i32
    %0 = arith.cmpi eq, %arg2, %c0_i32 : i32
    %1 = arith.extui %0 : i1 to i32
    %c0_i32_0 = arith.constant 0 : i32
    %2 = arith.cmpi ne, %1, %c0_i32_0 : i32
    scf.if %2 {
      %c0_41 = arith.constant 0 : index
      %c0_42 = arith.constant 0 : index
      %c0_43 = arith.constant 0 : index
      %74 = vector.load %arg3[%c0_41, %c0_42, %c0_43] : memref<1x8x32xbf16, #tpu.memory_space<vmem>>, vector<1x8x32xbf16>
      %75 = vector.shape_cast %74 : vector<1x8x32xbf16> to vector<8x32xbf16>
      %c0_44 = arith.constant 0 : index
      %c0_45 = arith.constant 0 : index
      %76 = vector.load %arg6[%c0_44, %c0_45] : memref<32x32xbf16, #tpu.memory_space<vmem>>, vector<32x32xbf16>
      %cst_46 = arith.constant dense<0.000000e+00> : vector<8x32xf32>
      %77 = tpu.matmul %75, %76, %cst_46 {dimension_numbers = #tpu.dot_dimension_numbers<[1], [0], [0], [1], [0, 0, 1, 1], [], []>} : vector<8x32xbf16>, vector<32x32xbf16>, vector<8x32xf32> -> vector<8x32xf32>
      %c0_47 = arith.constant 0 : index
      %c0_48 = arith.constant 0 : index
      %78 = vector.load %arg7[%c0_47, %c0_48] : memref<1x32xf32, #tpu.memory_space<vmem>>, vector<1x32xf32>
      %79 = vector.broadcast %78 : vector<1x32xf32> to vector<8x32xf32>
      %80 = arith.addf %77, %79 : vector<8x32xf32>
      %cst_49 = arith.constant 0.353553385 : f32
      %81 = vector.broadcast %cst_49 : f32 to vector<8x32xf32>
      %82 = arith.mulf %80, %81 : vector<8x32xf32>
      %83 = arith.truncf %82 : vector<8x32xf32> to vector<8x32xbf16>
      %c0_50 = arith.constant 0 : index
      %c0_51 = arith.constant 0 : index
      %84 = vector.load %arg15[%c0_50, %c0_51] : memref<8x32xbf16, #tpu.memory_space<vmem>>, vector<8x32xbf16>
      tpu.vector_store %arg15[%c0_50, %c0_51], %83 {strides = array<i32>} : memref<8x32xbf16, #tpu.memory_space<vmem>>, vector<8x32xbf16>,
      %cst_52 = arith.constant 0xFF800000 : f32
      %85 = vector.broadcast %cst_52 : f32 to vector<4x8x1xf32>
      %c0_53 = arith.constant 0 : index
      %c0_54 = arith.constant 0 : index
      %c0_55 = arith.constant 0 : index
      %86 = vector.load %arg16[%c0_53, %c0_54, %c0_55] : memref<4x8x1xf32, #tpu.memory_space<vmem>>, vector<4x8x1xf32>
      tpu.vector_store %arg16[%c0_53, %c0_54, %c0_55], %85 {strides = array<i32>} : memref<4x8x1xf32, #tpu.memory_space<vmem>>, vector<4x8x1xf32>,
      %cst_56 = arith.constant 0.000000e+00 : f32
      %87 = vector.broadcast %cst_56 : f32 to vector<4x8x1xf32>
      %c0_57 = arith.constant 0 : index
      %c0_58 = arith.constant 0 : index
      %c0_59 = arith.constant 0 : index
      %88 = vector.load %arg17[%c0_57, %c0_58, %c0_59] : memref<4x8x1xf32, #tpu.memory_space<vmem>>, vector<4x8x1xf32>
      tpu.vector_store %arg17[%c0_57, %c0_58, %c0_59], %87 {strides = array<i32>} : memref<4x8x1xf32, #tpu.memory_space<vmem>>, vector<4x8x1xf32>,
      %cst_60 = arith.constant 0.000000e+00 : f32
      %89 = vector.broadcast %cst_60 : f32 to vector<4x8x8xf32>
      %c0_61 = arith.constant 0 : index
      %c0_62 = arith.constant 0 : index
      %c0_63 = arith.constant 0 : index
      %90 = vector.load %arg18[%c0_61, %c0_62, %c0_63] : memref<4x8x8xf32, #tpu.memory_space<vmem>>, vector<4x8x8xf32>
      tpu.vector_store %arg18[%c0_61, %c0_62, %c0_63], %89 {strides = array<i32>} : memref<4x8x8xf32, #tpu.memory_space<vmem>>, vector<4x8x8xf32>,
    } else {
    }
    %c0 = arith.constant 0 : index
    %c0_1 = arith.constant 0 : index
    %c0_2 = arith.constant 0 : index
    %3 = vector.load %arg4[%c0, %c0_1, %c0_2] : memref<1x8x32xbf16, #tpu.memory_space<vmem>>, vector<1x8x32xbf16>
    %4 = vector.shape_cast %3 : vector<1x8x32xbf16> to vector<8x32xbf16>
    %c0_3 = arith.constant 0 : index
    %c0_4 = arith.constant 0 : index
    %5 = vector.load %arg8[%c0_3, %c0_4] : memref<32x32xbf16, #tpu.memory_space<vmem>>, vector<32x32xbf16>
    %cst = arith.constant dense<0.000000e+00> : vector<8x32xf32>
    %6 = tpu.matmul %4, %5, %cst {dimension_numbers = #tpu.dot_dimension_numbers<[1], [0], [0], [1], [0, 0, 1, 1], [], []>} : vector<8x32xbf16>, vector<32x32xbf16>, vector<8x32xf32> -> vector<8x32xf32>
    %c0_5 = arith.constant 0 : index
    %c0_6 = arith.constant 0 : index
    %7 = vector.load %arg9[%c0_5, %c0_6] : memref<1x32xf32, #tpu.memory_space<vmem>>, vector<1x32xf32>
    %8 = vector.broadcast %7 : vector<1x32xf32> to vector<8x32xf32>
    %9 = arith.addf %6, %8 : vector<8x32xf32>
    %10 = arith.truncf %9 : vector<8x32xf32> to vector<8x32xbf16>
    %c0_7 = arith.constant 0 : index
    %c0_8 = arith.constant 0 : index
    %c0_9 = arith.constant 0 : index
    %11 = vector.load %arg5[%c0_7, %c0_8, %c0_9] : memref<1x8x32xbf16, #tpu.memory_space<vmem>>, vector<1x8x32xbf16>
    %12 = vector.shape_cast %11 : vector<1x8x32xbf16> to vector<8x32xbf16>
    %c0_10 = arith.constant 0 : index
    %c0_11 = arith.constant 0 : index
    %13 = vector.load %arg10[%c0_10, %c0_11] : memref<32x32xbf16, #tpu.memory_space<vmem>>, vector<32x32xbf16>
    %cst_12 = arith.constant dense<0.000000e+00> : vector<8x32xf32>
    %14 = tpu.matmul %12, %13, %cst_12 {dimension_numbers = #tpu.dot_dimension_numbers<[1], [0], [0], [1], [0, 0, 1, 1], [], []>} : vector<8x32xbf16>, vector<32x32xbf16>, vector<8x32xf32> -> vector<8x32xf32>
    %c0_13 = arith.constant 0 : index
    %c0_14 = arith.constant 0 : index
    %15 = vector.load %arg11[%c0_13, %c0_14] : memref<1x32xf32, #tpu.memory_space<vmem>>, vector<1x32xf32>
    %16 = vector.broadcast %15 : vector<1x32xf32> to vector<8x32xf32>
    %17 = arith.addf %14, %16 : vector<8x32xf32>
    %18 = arith.truncf %17 : vector<8x32xf32> to vector<8x32xbf16>
    %c0_15 = arith.constant 0 : index
    %c0_16 = arith.constant 0 : index
    %19 = vector.load %arg15[%c0_15, %c0_16] : memref<8x32xbf16, #tpu.memory_space<vmem>>, vector<8x32xbf16>
    %20 = vector.extract_strided_slice %19 {offsets = [0, 0], sizes = [8, 8], strides = [1, 1]} : vector<8x32xbf16> to vector<8x8xbf16>
    %21 = vector.extract_strided_slice %19 {offsets = [0, 8], sizes = [8, 8], strides = [1, 1]} : vector<8x32xbf16> to vector<8x8xbf16>
    %22 = vector.extract_strided_slice %19 {offsets = [0, 16], sizes = [8, 8], strides = [1, 1]} : vector<8x32xbf16> to vector<8x8xbf16>
    %23 = vector.extract_strided_slice %19 {offsets = [0, 24], sizes = [8, 8], strides = [1, 1]} : vector<8x32xbf16> to vector<8x8xbf16>
    %24 = vector.shape_cast %20 : vector<8x8xbf16> to vector<1x8x8xbf16>
    %25 = vector.shape_cast %21 : vector<8x8xbf16> to vector<1x8x8xbf16>
    %26 = vector.shape_cast %22 : vector<8x8xbf16> to vector<1x8x8xbf16>
    %27 = vector.shape_cast %23 : vector<8x8xbf16> to vector<1x8x8xbf16>
    %28 = tpu.concatenate %24, %25, %26, %27 in 0 : vector<1x8x8xbf16>, vector<1x8x8xbf16>, vector<1x8x8xbf16>, vector<1x8x8xbf16> -> vector<4x8x8xbf16>
    %29 = vector.extract_strided_slice %10 {offsets = [0, 0], sizes = [8, 8], strides = [1, 1]} : vector<8x32xbf16> to vector<8x8xbf16>
    %30 = vector.extract_strided_slice %10 {offsets = [0, 8], sizes = [8, 8], strides = [1, 1]} : vector<8x32xbf16> to vector<8x8xbf16>
    %31 = vector.extract_strided_slice %10 {offsets = [0, 16], sizes = [8, 8], strides = [1, 1]} : vector<8x32xbf16> to vector<8x8xbf16>
    %32 = vector.extract_strided_slice %10 {offsets = [0, 24], sizes = [8, 8], strides = [1, 1]} : vector<8x32xbf16> to vector<8x8xbf16>
    %33 = vector.shape_cast %29 : vector<8x8xbf16> to vector<1x8x8xbf16>
    %34 = vector.shape_cast %30 : vector<8x8xbf16> to vector<1x8x8xbf16>
    %35 = vector.shape_cast %31 : vector<8x8xbf16> to vector<1x8x8xbf16>
    %36 = vector.shape_cast %32 : vector<8x8xbf16> to vector<1x8x8xbf16>
    %37 = tpu.concatenate %33, %34, %35, %36 in 0 : vector<1x8x8xbf16>, vector<1x8x8xbf16>, vector<1x8x8xbf16>, vector<1x8x8xbf16> -> vector<4x8x8xbf16>
    %38 = vector.extract_strided_slice %18 {offsets = [0, 0], sizes = [8, 8], strides = [1, 1]} : vector<8x32xbf16> to vector<8x8xbf16>
    %39 = vector.extract_strided_slice %18 {offsets = [0, 8], sizes = [8, 8], strides = [1, 1]} : vector<8x32xbf16> to vector<8x8xbf16>
    %40 = vector.extract_strided_slice %18 {offsets = [0, 16], sizes = [8, 8], strides = [1, 1]} : vector<8x32xbf16> to vector<8x8xbf16>
    %41 = vector.extract_strided_slice %18 {offsets = [0, 24], sizes = [8, 8], strides = [1, 1]} : vector<8x32xbf16> to vector<8x8xbf16>
    %42 = vector.shape_cast %38 : vector<8x8xbf16> to vector<1x8x8xbf16>
    %43 = vector.shape_cast %39 : vector<8x8xbf16> to vector<1x8x8xbf16>
    %44 = vector.shape_cast %40 : vector<8x8xbf16> to vector<1x8x8xbf16>
    %45 = vector.shape_cast %41 : vector<8x8xbf16> to vector<1x8x8xbf16>
    %46 = tpu.concatenate %42, %43, %44, %45 in 0 : vector<1x8x8xbf16>, vector<1x8x8xbf16>, vector<1x8x8xbf16>, vector<1x8x8xbf16> -> vector<4x8x8xbf16>
    "tpu.trace_start"() <{level = 10 : i32, message = "hqe,hke->hqk"}> : () -> ()
    %cst_17 = arith.constant dense<0.000000e+00> : vector<4x8x8xf32>
    %47 = tpu.matmul %28, %37, %cst_17 {dimension_numbers = #tpu.dot_dimension_numbers<[2], [2], [1], [1], [0, 0, 0, 1, 1, 1], [0], [0]>} : vector<4x8x8xbf16>, vector<4x8x8xbf16>, vector<4x8x8xf32> -> vector<4x8x8xf32>
    "tpu.trace_stop"() : () -> ()
    %c0_18 = arith.constant 0 : index
    %c0_19 = arith.constant 0 : index
    %c0_20 = arith.constant 0 : index
    %48 = vector.load %arg16[%c0_18, %c0_19, %c0_20] : memref<4x8x1xf32, #tpu.memory_space<vmem>>, vector<4x8x1xf32>
    %cst_21 = arith.constant dense<0xFF800000> : vector<4x8xf32>
    %49 = vector.multi_reduction <maximumf>, %47, %cst_21 [2] : vector<4x8x8xf32> to vector<4x8xf32>
    %50 = vector.shape_cast %49 : vector<4x8xf32> to vector<4x8x1xf32>
    %51 = arith.maximumf %48, %50 : vector<4x8x1xf32>
    %52 = arith.subf %48, %51 : vector<4x8x1xf32>
    %53 = math.exp %52 : vector<4x8x1xf32>
    %54 = vector.broadcast %51 : vector<4x8x1xf32> to vector<4x8x8xf32>
    %55 = arith.subf %47, %54 : vector<4x8x8xf32>
    %56 = math.exp %55 : vector<4x8x8xf32>
    %c0_22 = arith.constant 0 : index
    %c0_23 = arith.constant 0 : index
    %c0_24 = arith.constant 0 : index
    %57 = vector.load %arg17[%c0_22, %c0_23, %c0_24] : memref<4x8x1xf32, #tpu.memory_space<vmem>>, vector<4x8x1xf32>
    %58 = arith.mulf %53, %57 : vector<4x8x1xf32>
    %cst_25 = arith.constant dense<0.000000e+00> : vector<4x8xf32>
    %59 = vector.multi_reduction <add>, %56, %cst_25 [2] : vector<4x8x8xf32> to vector<4x8xf32>
    %60 = vector.shape_cast %59 : vector<4x8xf32> to vector<4x8x1xf32>
    %61 = arith.addf %58, %60 : vector<4x8x1xf32>
    %c0_26 = arith.constant 0 : index
    %c0_27 = arith.constant 0 : index
    %c0_28 = arith.constant 0 : index
    %62 = vector.load %arg17[%c0_26, %c0_27, %c0_28] : memref<4x8x1xf32, #tpu.memory_space<vmem>>, vector<4x8x1xf32>
    tpu.vector_store %arg17[%c0_26, %c0_27, %c0_28], %61 {strides = array<i32>} : memref<4x8x1xf32, #tpu.memory_space<vmem>>, vector<4x8x1xf32>,
    %63 = arith.truncf %56 : vector<4x8x8xf32> to vector<4x8x8xbf16>
    "tpu.trace_start"() <{level = 10 : i32, message = "hqk,hkd->hqd"}> : () -> ()
    %cst_29 = arith.constant dense<0.000000e+00> : vector<4x8x8xf32>
    %64 = tpu.matmul %63, %46, %cst_29 {dimension_numbers = #tpu.dot_dimension_numbers<[2], [1], [1], [2], [0, 0, 0, 1, 1, 2], [0], [0]>} : vector<4x8x8xbf16>, vector<4x8x8xbf16>, vector<4x8x8xf32> -> vector<4x8x8xf32>
    "tpu.trace_stop"() : () -> ()
    %c0_30 = arith.constant 0 : index
    %c0_31 = arith.constant 0 : index
    %c0_32 = arith.constant 0 : index
    %65 = vector.load %arg18[%c0_30, %c0_31, %c0_32] : memref<4x8x8xf32, #tpu.memory_space<vmem>>, vector<4x8x8xf32>
    %66 = vector.broadcast %53 : vector<4x8x1xf32> to vector<4x8x8xf32>
    %67 = arith.mulf %66, %65 : vector<4x8x8xf32>
    %68 = arith.addf %67, %64 : vector<4x8x8xf32>
    %c0_33 = arith.constant 0 : index
    %c0_34 = arith.constant 0 : index
    %c0_35 = arith.constant 0 : index
    %69 = vector.load %arg18[%c0_33, %c0_34, %c0_35] : memref<4x8x8xf32, #tpu.memory_space<vmem>>, vector<4x8x8xf32>
    tpu.vector_store %arg18[%c0_33, %c0_34, %c0_35], %68 {strides = array<i32>} : memref<4x8x8xf32, #tpu.memory_space<vmem>>, vector<4x8x8xf32>,
    %c0_36 = arith.constant 0 : index
    %c0_37 = arith.constant 0 : index
    %c0_38 = arith.constant 0 : index
    %70 = vector.load %arg16[%c0_36, %c0_37, %c0_38] : memref<4x8x1xf32, #tpu.memory_space<vmem>>, vector<4x8x1xf32>
    tpu.vector_store %arg16[%c0_36, %c0_37, %c0_38], %51 {strides = array<i32>} : memref<4x8x1xf32, #tpu.memory_space<vmem>>, vector<4x8x1xf32>,
    %c0_i32_39 = arith.constant 0 : i32
    %71 = arith.cmpi eq, %arg2, %c0_i32_39 : i32
    %72 = arith.extui %71 : i1 to i32
    %c0_i32_40 = arith.constant 0 : i32
    %73 = arith.cmpi ne, %72, %c0_i32_40 : i32
    scf.if %73 {
      %c0_41 = arith.constant 0 : index
      %c0_42 = arith.constant 0 : index
      %c0_43 = arith.constant 0 : index
      %74 = vector.load %arg18[%c0_41, %c0_42, %c0_43] : memref<4x8x8xf32, #tpu.memory_space<vmem>>, vector<4x8x8xf32>
      %c0_44 = arith.constant 0 : index
      %c0_45 = arith.constant 0 : index
      %c0_46 = arith.constant 0 : index
      %75 = vector.load %arg17[%c0_44, %c0_45, %c0_46] : memref<4x8x1xf32, #tpu.memory_space<vmem>>, vector<4x8x1xf32>
      %76 = tpu.reciprocal %75 {approx = true} : vector<4x8x1xf32> -> vector<4x8x1xf32>
      %77 = vector.broadcast %76 : vector<4x8x1xf32> to vector<4x8x8xf32>
      %78 = arith.mulf %74, %77 : vector<4x8x8xf32>
      %79 = vector.extract_strided_slice %78 {offsets = [0, 0, 0], sizes = [1, 8, 8], strides = [1, 1, 1]} : vector<4x8x8xf32> to vector<1x8x8xf32>
      %80 = vector.shape_cast %79 : vector<1x8x8xf32> to vector<8x8xf32>
      %81 = vector.extract_strided_slice %78 {offsets = [1, 0, 0], sizes = [1, 8, 8], strides = [1, 1, 1]} : vector<4x8x8xf32> to vector<1x8x8xf32>
      %82 = vector.shape_cast %81 : vector<1x8x8xf32> to vector<8x8xf32>
      %83 = vector.extract_strided_slice %78 {offsets = [2, 0, 0], sizes = [1, 8, 8], strides = [1, 1, 1]} : vector<4x8x8xf32> to vector<1x8x8xf32>
      %84 = vector.shape_cast %83 : vector<1x8x8xf32> to vector<8x8xf32>
      %85 = vector.extract_strided_slice %78 {offsets = [3, 0, 0], sizes = [1, 8, 8], strides = [1, 1, 1]} : vector<4x8x8xf32> to vector<1x8x8xf32>
      %86 = vector.shape_cast %85 : vector<1x8x8xf32> to vector<8x8xf32>
      %87 = tpu.concatenate %80, %82, %84, %86 in 1 : vector<8x8xf32>, vector<8x8xf32>, vector<8x8xf32>, vector<8x8xf32> -> vector<8x32xf32>
      %88 = arith.truncf %87 : vector<8x32xf32> to vector<8x32xbf16>
      %c0_47 = arith.constant 0 : index
      %c0_48 = arith.constant 0 : index
      %89 = vector.load %arg12[%c0_47, %c0_48] : memref<32x32xbf16, #tpu.memory_space<vmem>>, vector<32x32xbf16>
      %cst_49 = arith.constant dense<0.000000e+00> : vector<8x32xf32>
      %90 = tpu.matmul %88, %89, %cst_49 {dimension_numbers = #tpu.dot_dimension_numbers<[1], [0], [0], [1], [0, 0, 1, 1], [], []>} : vector<8x32xbf16>, vector<32x32xbf16>, vector<8x32xf32> -> vector<8x32xf32>
      %c0_50 = arith.constant 0 : index
      %c0_51 = arith.constant 0 : index
      %91 = vector.load %arg13[%c0_50, %c0_51] : memref<1x32xf32, #tpu.memory_space<vmem>>, vector<1x32xf32>
      %92 = vector.broadcast %91 : vector<1x32xf32> to vector<8x32xf32>
      %93 = arith.addf %90, %92 : vector<8x32xf32>
      %c0_52 = arith.constant 0 : index
      %c0_53 = arith.constant 0 : index
      %c0_54 = arith.constant 0 : index
      %94 = vector.load %arg14[%c0_52, %c0_53, %c0_54] : memref<1x8x32xf32, #tpu.memory_space<vmem>>, vector<1x8x32xf32>
      %95 = vector.shape_cast %94 : vector<1x8x32xf32> to vector<8x32xf32>
      %96 = vector.shape_cast %93 : vector<8x32xf32> to vector<1x8x32xf32>
      tpu.vector_store %arg14[%c0_52, %c0_53, %c0_54], %96 {strides = array<i32>} : memref<1x8x32xf32, #tpu.memory_space<vmem>>, vector<1x8x32xf32>,
    } else {
    }
    return
  }
  func.func @transform_0(%arg0: i32, %arg1: i32, %arg2: i32) -> (i32, i32, i32) {
    %c0_i32 = arith.constant 0 : i32
    %c0_i32_0 = arith.constant 0 : i32
    return %arg0, %arg1, %c0_i32 : i32, i32, i32
  }
  func.func @transform_1(%arg0: i32, %arg1: i32, %arg2: i32) -> (i32, i32, i32) {
    %c0_i32 = arith.constant 0 : i32
    %c0_i32_0 = arith.constant 0 : i32
    return %arg0, %arg2, %c0_i32 : i32, i32, i32
  }
  func.func @transform_2(%arg0: i32, %arg1: i32, %arg2: i32) -> (i32, i32, i32) {
    %c0_i32 = arith.constant 0 : i32
    %c0_i32_0 = arith.constant 0 : i32
    return %arg0, %arg2, %c0_i32 : i32, i32, i32
  }
  func.func @transform_3(%arg0: i32, %arg1: i32, %arg2: i32) -> (i32, i32) {
    %c0_i32 = arith.constant 0 : i32
    %c0_i32_0 = arith.constant 0 : i32
    %c0_i32_1 = arith.constant 0 : i32
    return %c0_i32, %c0_i32_0 : i32, i32
  }
  func.func @transform_4(%arg0: i32, %arg1: i32, %arg2: i32) -> (i32, i32) {
    %c0_i32 = arith.constant 0 : i32
    %c0_i32_0 = arith.constant 0 : i32
    %c0_i32_1 = arith.constant 0 : i32
    return %c0_i32, %c0_i32_0 : i32, i32
  }
  func.func @transform_5(%arg0: i32, %arg1: i32, %arg2: i32) -> (i32, i32) {
    %c0_i32 = arith.constant 0 : i32
    %c0_i32_0 = arith.constant 0 : i32
    %c0_i32_1 = arith.constant 0 : i32
    return %c0_i32, %c0_i32_0 : i32, i32
  }
  func.func @transform_6(%arg0: i32, %arg1: i32, %arg2: i32) -> (i32, i32) {
    %c0_i32 = arith.constant 0 : i32
    %c0_i32_0 = arith.constant 0 : i32
    %c0_i32_1 = arith.constant 0 : i32
    return %c0_i32, %c0_i32_0 : i32, i32
  }
  func.func @transform_7(%arg0: i32, %arg1: i32, %arg2: i32) -> (i32, i32) {
    %c0_i32 = arith.constant 0 : i32
    %c0_i32_0 = arith.constant 0 : i32
    %c0_i32_1 = arith.constant 0 : i32
    return %c0_i32, %c0_i32_0 : i32, i32
  }
  func.func @transform_8(%arg0: i32, %arg1: i32, %arg2: i32) -> (i32, i32) {
    %c0_i32 = arith.constant 0 : i32
    %c0_i32_0 = arith.constant 0 : i32
    %c0_i32_1 = arith.constant 0 : i32
    return %c0_i32, %c0_i32_0 : i32, i32
  }
  func.func @transform_9(%arg0: i32, %arg1: i32, %arg2: i32) -> (i32, i32) {
    %c0_i32 = arith.constant 0 : i32
    %c0_i32_0 = arith.constant 0 : i32
    %c0_i32_1 = arith.constant 0 : i32
    return %c0_i32, %c0_i32_0 : i32, i32
  }
  func.func @transform_10(%arg0: i32, %arg1: i32, %arg2: i32) -> (i32, i32) {
    %c0_i32 = arith.constant 0 : i32
    %c0_i32_0 = arith.constant 0 : i32
    %c0_i32_1 = arith.constant 0 : i32
    return %c0_i32, %c0_i32_0 : i32, i32
  }
  func.func @transform_11(%arg0: i32, %arg1: i32, %arg2: i32) -> (i32, i32, i32) {
    %c0_i32 = arith.constant 0 : i32
    %c0_i32_0 = arith.constant 0 : i32
    return %arg0, %arg1, %c0_i32 : i32, i32, i32
  }
}

</mosaic_0001>

<llo_original>
// kernel: tpu_custom_call.1
$region0: #{tpu_custom_call.1}
  #allocation0 [shape = 'u32[]', space=smem, size = 0x4, offset = 0x4, fixed_abs, tag = 'smem constant byte address 0x4 - core index']
  #allocation1 [shape = 'u32[72,128]{1,0:T(1,128)}', space=vmem, size = 0x9000, scoped, tag = 'internal scratch']
  #allocation2 [shape = 'bf16[8,32]{1,0:T(8,128)(2,1)}', space=vmem, size = 0x800, scoped, tag = 'scratch operand']
  #allocation3 [shape = 'f32[4,8,1]{2,1,0:T(8,128)}', space=vmem, size = 0x4000, scoped, tag = 'scratch operand']
  #allocation4 [shape = 'f32[4,8,1]{2,1,0:T(8,128)}', space=vmem, size = 0x4000, scoped, tag = 'scratch operand']
  #allocation5 [shape = 'f32[4,8,8]{2,1,0:T(8,128)}', space=vmem, size = 0x4000, scoped, tag = 'scratch operand']
  %s0 = inlined_call_operand.hbm [shape: bf16[2,8,32], index: 0, kind: input, shape index: {}]
  %s1 = inlined_call_operand.hbm [shape: bf16[2,8,32], index: 1, kind: input, shape index: {}]
  %s2 = inlined_call_operand.hbm [shape: bf16[2,8,32], index: 2, kind: input, shape index: {}]
  %s3 = inlined_call_operand.hbm [shape: bf16[32,32], index: 3, kind: input, shape index: {}]
  %s4 = inlined_call_operand.vmem [shape: f32[1,32], index: 4, kind: input, shape index: {}]
  %s5 = inlined_call_operand.hbm [shape: bf16[32,32], index: 5, kind: input, shape index: {}]
  %s6 = inlined_call_operand.vmem [shape: f32[1,32], index: 6, kind: input, shape index: {}]
  %s7 = inlined_call_operand.hbm [shape: bf16[32,32], index: 7, kind: input, shape index: {}]
  %s8 = inlined_call_operand.vmem [shape: f32[1,32], index: 8, kind: input, shape index: {}]
  %s9 = inlined_call_operand.hbm [shape: bf16[32,32], index: 9, kind: input, shape index: {}]
  %s10 = inlined_call_operand.vmem [shape: f32[1,32], index: 10, kind: input, shape index: {}]
  %s11 = inlined_call_operand.hbm [shape: f32[2,8,32], index: 11, kind: output, shape index: {}]
  %s12 = sld [smem:[#allocation0]]
  $region113: #{tpu_custom_call.1} parent=0
    _
  %s14 = ssub.s32 1, %s12
  %s15 = scalar_select 0, %s14, %s12
  $region1: #{tpu_custom_call.1} parent=0
    #allocation6 [shape = 'u8[4096]{0}', space=vmem, size = 0x1000, scoped, tag = 'input window, operand 0']
    #allocation7 [shape = 's32[2]{0}', space=sflag, size = 0x8, scoped, tag = 'scoped memory for tpu_custom_call.1']
    #allocation8 [shape = 's32[2]{0}', space=sflag, size = 0x8, scoped, tag = 'scoped memory for tpu_custom_call.1']
    #allocation9 [shape = 'u8[4096]{0}', space=vmem, size = 0x1000, scoped, tag = 'input window, operand 1']
    #allocation10 [shape = 's32[2]{0}', space=sflag, size = 0x8, scoped, tag = 'scoped memory for tpu_custom_call.1']
    #allocation11 [shape = 'u8[4096]{0}', space=vmem, size = 0x1000, scoped, tag = 'input window, operand 2']
    #allocation12 [shape = 'u8[8192]{0}', space=vmem, size = 0x2000, scoped, tag = 'input window, operand 3, single buffered']
    #allocation13 [shape = 's32[1]{0}', space=sflag, size = 0x4, scoped, tag = 'scoped memory for tpu_custom_call.1']
    #allocation14 [shape = 'u8[8192]{0}', space=vmem, size = 0x2000, scoped, tag = 'input window, operand 5, single buffered']
    #allocation15 [shape = 'u8[8192]{0}', space=vmem, size = 0x2000, scoped, tag = 'input window, operand 7, single buffered']
    #allocation16 [shape = 's32[1]{0}', space=sflag, size = 0x4, scoped, tag = 'scoped memory for tpu_custom_call.1']
    #allocation17 [shape = 'u8[8192]{0}', space=vmem, size = 0x2000, scoped, tag = 'input window, operand 9, single buffered']
    #allocation18 [shape = 'u8[8192]{0}', space=vmem, size = 0x2000, scoped, tag = 'output window, operand 0']
    %16 = vsyncpa [#allocation7], 0
    %s17 = scalar_lea.sflag [#allocation7], 1
    %18 = vsyncpa %s17, 0
    %19 = vsyncpa [#allocation10], 0
    %s20 = scalar_lea.sflag [#allocation10], 1
    %21 = vsyncpa %s20, 0
    %22 = vsyncpa [#allocation13], 0
    %23 = vsyncpa [#allocation16], 0
    %24 = vsyncpa [#allocation8], 0
    %s25 = scalar_lea.sflag [#allocation8], 1
    %26 = vsyncpa %s25, 0
    loop: start=0, step=1, limit=4
    $region2: #{tpu_custom_call.1} parent=1 // loop_pre_header
      _
    $region3: #{tpu_custom_call.1} parent=1 // loop_header
      %s28 = sphi 0, %s32
      %p29 = scmp.ge.s32.totalorder %s28, 4
      %s35 = sphi 0, %s54
      %s36 = sphi 0, %s50
      %s37 = sphi 0, %s46
      %s38 = sphi 0, %s35
      %s39 = sphi 0, %s36
      %s40 = sphi 0, %s37
      %s41 = sphi 0, %s38
      %s42 = sphi 0, %s39
      %s43 = sphi 0, %s40
      %s59 = sphi 0, %s61
      %s62 = sphi 0, %s59
      %s63 = sphi 0, %s62
      %s79 = sphi 0, %s63
      %s87 = sphi 0, %s89
      %s90 = sphi 0, %s87
      %s91 = sphi 0, %s90
      %s107 = sphi 0, %s91
      %s115 = sphi 0, %s117
      %s118 = sphi 0, %s115
      %s119 = sphi 0, %s118
      %s135 = sphi 0, %s119
      %s139 = sphi 0, %s139
      %s141 = sphi 0, %s139
      %s142 = sphi 0, %s141
      %s156 = sphi 0, %s142
      %s160 = sphi 0, %s160
      %s162 = sphi 0, %s160
      %s163 = sphi 0, %s162
      %s177 = sphi 0, %s163
      %s181 = sphi 0, %s181
      %s183 = sphi 0, %s181
      %s184 = sphi 0, %s183
      %s198 = sphi 0, %s184
      %s202 = sphi 0, %s202
      %s204 = sphi 0, %s202
      %s205 = sphi 0, %s204
      %s219 = sphi 0, %s205
      %s223 = sphi 0, %s223
      %s225 = sphi 0, %s223
      %s226 = sphi 0, %s225
      %s240 = sphi 0, %s226
      %s244 = sphi 0, %s244
      %s246 = sphi 0, %s244
      %s247 = sphi 0, %s246
      %s261 = sphi 0, %s247
      %s265 = sphi 0, %s265
      %s267 = sphi 0, %s265
      %s268 = sphi 0, %s267
      %s282 = sphi 0, %s268
      %s286 = sphi 0, %s286
      %s288 = sphi 0, %s286
      %s289 = sphi 0, %s288
      %s303 = sphi 0, %s289
      %s311 = sphi 0, %s313
      %s314 = sphi 0, %s311
      %s315 = sphi 0, %s314
      %s331 = sphi 0, %s315
    $region4: #{tpu_custom_call.1} parent=1 // loop_header_branch
      %31 = sbr.rel (%p29) target = $region8
    $region5: #{tpu_custom_call.1} parent=1 // loop_body
      %s33 = ssub.s32 %s28, 1
      %s34 = ssub.s32 %s28, 2
      %s44 = sadd.s32 1, %s37
      %p45 = scmp.ge.s32.totalorder %s44, 1
      %s46 = scalar_select %p45, 0, %s44
      %s47 = sadd.s32 1, %s36
      %s48 = scalar_select %p45, %s47, %s36
      %p49 = scmp.ge.s32.totalorder %s48, 1
      %s50 = scalar_select %p49, 0, %s48
      %s51 = sadd.s32 1, %s35
      %s52 = scalar_select %p49, %s51, %s35
      %p53 = scmp.ge.s32.totalorder %s52, 2
      %s54 = scalar_select %p53, 0, %s52
      %s55 = ssub.s32 %s35, %s54
      %s56 = ssub.s32 %s36, %s50
      %s57 = sor.u32 %s55, %s56
      %p58 = scmp.eq.s32.totalorder %s57, 0
      %s60 = sadd.s32 %s59, 1
      %s61 = scalar_select %p58, %s59, %s60
      %p64 = pneg %p58
      %p65 = scmp.eq.s32.totalorder %s28, 1
      %p66 = por %p64, %p65
      %p67 = scmp.ne.s32.totalorder %s59, %s62
      %p68 = scmp.eq.s32.totalorder %s28, 0
      %p69 = por %p67, %p68
      %p70 = scmp.ne.s32.totalorder %s59, %s62
      %p71 = scmp.eq.s32.totalorder %s33, 1
      %p72 = por %p70, %p71
      %p73 = scmp.ne.s32.totalorder %s62, %s63
      %p74 = scmp.eq.s32.totalorder %s33, 0
      %p75 = por %p73, %p74
      %p76 = scmp.ne.s32.totalorder %s62, %s63
      %p77 = scmp.eq.s32.totalorder %s34, 1
      %p78 = por %p76, %p77
      %p80 = scmp.ne.s32.totalorder %s63, %s79
      %p81 = scmp.eq.s32.totalorder %s34, 0
      %p82 = por %p80, %p81
      %s83 = ssub.s32 %s35, %s54
      %s84 = ssub.s32 %s37, %s46
      %s85 = sor.u32 %s83, %s84
      %p86 = scmp.eq.s32.totalorder %s85, 0
      %s88 = sadd.s32 %s87, 1
      %s89 = scalar_select %p86, %s87, %s88
      %p92 = pneg %p86
      %p93 = scmp.eq.s32.totalorder %s28, 1
      %p94 = por %p92, %p93
      %p95 = scmp.ne.s32.totalorder %s87, %s90
      %p96 = scmp.eq.s32.totalorder %s28, 0
      %p97 = por %p95, %p96
      %p98 = scmp.ne.s32.totalorder %s87, %s90
      %p99 = scmp.eq.s32.totalorder %s33, 1
      %p100 = por %p98, %p99
      %p101 = scmp.ne.s32.totalorder %s90, %s91
      %p102 = scmp.eq.s32.totalorder %s33, 0
      %p103 = por %p101, %p102
      %p104 = scmp.ne.s32.totalorder %s90, %s91
      %p105 = scmp.eq.s32.totalorder %s34, 1
      %p106 = por %p104, %p105
      %p108 = scmp.ne.s32.totalorder %s91, %s107
      %p109 = scmp.eq.s32.totalorder %s34, 0
      %p110 = por %p108, %p109
      %s111 = ssub.s32 %s35, %s54
      %s112 = ssub.s32 %s37, %s46
      %s113 = sor.u32 %s111, %s112
      %p114 = scmp.eq.s32.totalorder %s113, 0
      %s116 = sadd.s32 %s115, 1
      %s117 = scalar_select %p114, %s115, %s116
      %p120 = pneg %p114
      %p121 = scmp.eq.s32.totalorder %s28, 1
      %p122 = por %p120, %p121
      %p123 = scmp.ne.s32.totalorder %s115, %s118
      %p124 = scmp.eq.s32.totalorder %s28, 0
      %p125 = por %p123, %p124
      %p126 = scmp.ne.s32.totalorder %s115, %s118
      %p127 = scmp.eq.s32.totalorder %s33, 1
      %p128 = por %p126, %p127
      %p129 = scmp.ne.s32.totalorder %s118, %s119
      %p130 = scmp.eq.s32.totalorder %s33, 0
      %p131 = por %p129, %p130
      %p132 = scmp.ne.s32.totalorder %s118, %s119
      %p133 = scmp.eq.s32.totalorder %s34, 1
      %p134 = por %p132, %p133
      %p136 = scmp.ne.s32.totalorder %s119, %s135
      %p137 = scmp.eq.s32.totalorder %s34, 0
      %p138 = por %p136, %p137
      %s140 = sadd.s32 %s139, 1
      %p143 = scmp.eq.s32.totalorder %s28, 1
      %p144 = scmp.ne.s32.totalorder %s139, %s141
      %p145 = scmp.eq.s32.totalorder %s28, 0
      %p146 = por %p144, %p145
      %p147 = scmp.ne.s32.totalorder %s139, %s141
      %p148 = scmp.eq.s32.totalorder %s33, 1
      %p149 = por %p147, %p148
      %p150 = scmp.ne.s32.totalorder %s141, %s142
      %p151 = scmp.eq.s32.totalorder %s33, 0
      %p152 = por %p150, %p151
      %p153 = scmp.ne.s32.totalorder %s141, %s142
      %p154 = scmp.eq.s32.totalorder %s34, 1
      %p155 = por %p153, %p154
      %p157 = scmp.ne.s32.totalorder %s142, %s156
      %p158 = scmp.eq.s32.totalorder %s34, 0
      %p159 = por %p157, %p158
      %s161 = sadd.s32 %s160, 1
      %p164 = scmp.eq.s32.totalorder %s28, 1
      %p165 = scmp.ne.s32.totalorder %s160, %s162
      %p166 = scmp.eq.s32.totalorder %s28, 0
      %p167 = por %p165, %p166
      %p168 = scmp.ne.s32.totalorder %s160, %s162
      %p169 = scmp.eq.s32.totalorder %s33, 1
      %p170 = por %p168, %p169
      %p171 = scmp.ne.s32.totalorder %s162, %s163
      %p172 = scmp.eq.s32.totalorder %s33, 0
      %p173 = por %p171, %p172
      %p174 = scmp.ne.s32.totalorder %s162, %s163
      %p175 = scmp.eq.s32.totalorder %s34, 1
      %p176 = por %p174, %p175
      %p178 = scmp.ne.s32.totalorder %s163, %s177
      %p179 = scmp.eq.s32.totalorder %s34, 0
      %p180 = por %p178, %p179
      %s182 = sadd.s32 %s181, 1
      %p185 = scmp.eq.s32.totalorder %s28, 1
      %p186 = scmp.ne.s32.totalorder %s181, %s183
      %p187 = scmp.eq.s32.totalorder %s28, 0
      %p188 = por %p186, %p187
      %p189 = scmp.ne.s32.totalorder %s181, %s183
      %p190 = scmp.eq.s32.totalorder %s33, 1
      %p191 = por %p189, %p190
      %p192 = scmp.ne.s32.totalorder %s183, %s184
      %p193 = scmp.eq.s32.totalorder %s33, 0
      %p194 = por %p192, %p193
      %p195 = scmp.ne.s32.totalorder %s183, %s184
      %p196 = scmp.eq.s32.totalorder %s34, 1
      %p197 = por %p195, %p196
      %p199 = scmp.ne.s32.totalorder %s184, %s198
      %p200 = scmp.eq.s32.totalorder %s34, 0
      %p201 = por %p199, %p200
      %s203 = sadd.s32 %s202, 1
      %p206 = scmp.eq.s32.totalorder %s28, 1
      %p207 = scmp.ne.s32.totalorder %s202, %s204
      %p208 = scmp.eq.s32.totalorder %s28, 0
      %p209 = por %p207, %p208
      %p210 = scmp.ne.s32.totalorder %s202, %s204
      %p211 = scmp.eq.s32.totalorder %s33, 1
      %p212 = por %p210, %p211
      %p213 = scmp.ne.s32.totalorder %s204, %s205
      %p214 = scmp.eq.s32.totalorder %s33, 0
      %p215 = por %p213, %p214
      %p216 = scmp.ne.s32.totalorder %s204, %s205
      %p217 = scmp.eq.s32.totalorder %s34, 1
      %p218 = por %p216, %p217
      %p220 = scmp.ne.s32.totalorder %s205, %s219
      %p221 = scmp.eq.s32.totalorder %s34, 0
      %p222 = por %p220, %p221
      %s224 = sadd.s32 %s223, 1
      %p227 = scmp.eq.s32.totalorder %s28, 1
      %p228 = scmp.ne.s32.totalorder %s223, %s225
      %p229 = scmp.eq.s32.totalorder %s28, 0
      %p230 = por %p228, %p229
      %p231 = scmp.ne.s32.totalorder %s223, %s225
      %p232 = scmp.eq.s32.totalorder %s33, 1
      %p233 = por %p231, %p232
      %p234 = scmp.ne.s32.totalorder %s225, %s226
      %p235 = scmp.eq.s32.totalorder %s33, 0
      %p236 = por %p234, %p235
      %p237 = scmp.ne.s32.totalorder %s225, %s226
      %p238 = scmp.eq.s32.totalorder %s34, 1
      %p239 = por %p237, %p238
      %p241 = scmp.ne.s32.totalorder %s226, %s240
      %p242 = scmp.eq.s32.totalorder %s34, 0
      %p243 = por %p241, %p242
      %s245 = sadd.s32 %s244, 1
      %p248 = scmp.eq.s32.totalorder %s28, 1
      %p249 = scmp.ne.s32.totalorder %s244, %s246
      %p250 = scmp.eq.s32.totalorder %s28, 0
      %p251 = por %p249, %p250
      %p252 = scmp.ne.s32.totalorder %s244, %s246
      %p253 = scmp.eq.s32.totalorder %s33, 1
      %p254 = por %p252, %p253
      %p255 = scmp.ne.s32.totalorder %s246, %s247
      %p256 = scmp.eq.s32.totalorder %s33, 0
      %p257 = por %p255, %p256
      %p258 = scmp.ne.s32.totalorder %s246, %s247
      %p259 = scmp.eq.s32.totalorder %s34, 1
      %p260 = por %p258, %p259
      %p262 = scmp.ne.s32.totalorder %s247, %s261
      %p263 = scmp.eq.s32.totalorder %s34, 0
      %p264 = por %p262, %p263
      %s266 = sadd.s32 %s265, 1
      %p269 = scmp.eq.s32.totalorder %s28, 1
      %p270 = scmp.ne.s32.totalorder %s265, %s267
      %p271 = scmp.eq.s32.totalorder %s28, 0
      %p272 = por %p270, %p271
      %p273 = scmp.ne.s32.totalorder %s265, %s267
      %p274 = scmp.eq.s32.totalorder %s33, 1
      %p275 = por %p273, %p274
      %p276 = scmp.ne.s32.totalorder %s267, %s268
      %p277 = scmp.eq.s32.totalorder %s33, 0
      %p278 = por %p276, %p277
      %p279 = scmp.ne.s32.totalorder %s267, %s268
      %p280 = scmp.eq.s32.totalorder %s34, 1
      %p281 = por %p279, %p280
      %p283 = scmp.ne.s32.totalorder %s268, %s282
      %p284 = scmp.eq.s32.totalorder %s34, 0
      %p285 = por %p283, %p284
      %s287 = sadd.s32 %s286, 1
      %p290 = scmp.eq.s32.totalorder %s28, 1
      %p291 = scmp.ne.s32.totalorder %s286, %s288
      %p292 = scmp.eq.s32.totalorder %s28, 0
      %p293 = por %p291, %p292
      %p294 = scmp.ne.s32.totalorder %s286, %s288
      %p295 = scmp.eq.s32.totalorder %s33, 1
      %p296 = por %p294, %p295
      %p297 = scmp.ne.s32.totalorder %s288, %s289
      %p298 = scmp.eq.s32.totalorder %s33, 0
      %p299 = por %p297, %p298
      %p300 = scmp.ne.s32.totalorder %s288, %s289
      %p301 = scmp.eq.s32.totalorder %s34, 1
      %p302 = por %p300, %p301
      %p304 = scmp.ne.s32.totalorder %s289, %s303
      %p305 = scmp.eq.s32.totalorder %s34, 0
      %p306 = por %p304, %p305
      %s307 = ssub.s32 %s35, %s54
      %s308 = ssub.s32 %s36, %s50
      %s309 = sor.u32 %s307, %s308
      %p310 = scmp.eq.s32.totalorder %s309, 0
      %s312 = sadd.s32 %s311, 1
      %s313 = scalar_select %p310, %s311, %s312
      %p316 = pneg %p310
      %p317 = scmp.eq.s32.totalorder %s28, 1
      %p318 = por %p316, %p317
      %p319 = scmp.ne.s32.totalorder %s311, %s314
      %p320 = scmp.eq.s32.totalorder %s28, 0
      %p321 = por %p319, %p320
      %p322 = scmp.ne.s32.totalorder %s311, %s314
      %p323 = scmp.eq.s32.totalorder %s33, 1
      %p324 = por %p322, %p323
      %p325 = scmp.ne.s32.totalorder %s314, %s315
      %p326 = scmp.eq.s32.totalorder %s33, 0
      %p327 = por %p325, %p326
      %p328 = scmp.ne.s32.totalorder %s314, %s315
      %p329 = scmp.eq.s32.totalorder %s34, 1
      %p330 = por %p328, %p329
      %p332 = scmp.ne.s32.totalorder %s315, %s331
      %p333 = scmp.eq.s32.totalorder %s34, 0
      %p334 = por %p332, %p333
      %p335 = scmp.le.s32.totalorder 1, %s28
      %p336 = scmp.lt.s32.totalorder %s28, 3
      %p337 = pnand %p335, %p336
      %p338 = pneg %p337
      // Predicated region
      $region9: #{tpu_custom_call.1} parent=5 // pred_check
        _
      $region10: #{tpu_custom_call.1} parent=5 // pred_check_branch
        %340 = sbr.rel (%p337) target = $region12
      $region11: #{tpu_custom_call.1} parent=5 // pred_region
        %s341 = ssub.s32 %s28, 1
        // Predicated region
        $region13: #{tpu_custom_call.1} parent=11 // pred_check
          %p342 = pneg %p152
        $region14: #{tpu_custom_call.1} parent=11 // pred_check_branch
          %344 = sbr.rel (%p342) target = $region16
        $region15: #{tpu_custom_call.1} parent=11 // pred_region
          %346 = vsyncadd [#allocation13], 0
          %s347 = sshll.u32 %s3, 4
          %s348 = int_to_ptr.hbm [resolvable:$true] %s347
          %s349 = sshll.u32 [#allocation12], 4
          %s350 = int_to_ptr.vmem [resolvable:$true] %s349
          %355 = dma.hbm_to_vmem [thread:$0]  %s348, 256, %s350, [#allocation13], 64, 64, 4
        $region16: #{tpu_custom_call.1} parent=11 // pred_fallthru
          _
        // Predicated region
        $region17: #{tpu_custom_call.1} parent=11 // pred_check
          %p356 = pneg %p173
        $region18: #{tpu_custom_call.1} parent=11 // pred_check_branch
          %358 = sbr.rel (%p356) target = $region20
        $region19: #{tpu_custom_call.1} parent=11 // pred_region
          _
        $region20: #{tpu_custom_call.1} parent=11 // pred_fallthru
          _
        // Predicated region
        $region21: #{tpu_custom_call.1} parent=11 // pred_check
          %p359 = pneg %p194
        $region22: #{tpu_custom_call.1} parent=11 // pred_check_branch
          %361 = sbr.rel (%p359) target = $region24
        $region23: #{tpu_custom_call.1} parent=11 // pred_region
          %363 = vsyncadd [#allocation13], 0
          %s364 = sshll.u32 %s5, 4
          %s365 = int_to_ptr.hbm [resolvable:$true] %s364
          %s366 = sshll.u32 [#allocation14], 4
          %s367 = int_to_ptr.vmem [resolvable:$true] %s366
          %372 = dma.hbm_to_vmem [thread:$0]  %s365, 256, %s367, [#allocation13], 64, 64, 4
        $region24: #{tpu_custom_call.1} parent=11 // pred_fallthru
          _
        // Predicated region
        $region25: #{tpu_custom_call.1} parent=11 // pred_check
          %p373 = pneg %p215
        $region26: #{tpu_custom_call.1} parent=11 // pred_check_branch
          %375 = sbr.rel (%p373) target = $region28
        $region27: #{tpu_custom_call.1} parent=11 // pred_region
          _
        $region28: #{tpu_custom_call.1} parent=11 // pred_fallthru
          _
        // Predicated region
        $region29: #{tpu_custom_call.1} parent=11 // pred_check
          %p376 = pneg %p236
        $region30: #{tpu_custom_call.1} parent=11 // pred_check_branch
          %378 = sbr.rel (%p376) target = $region32
        $region31: #{tpu_custom_call.1} parent=11 // pred_region
          %380 = vsyncadd [#allocation16], 0
          %s381 = sshll.u32 %s7, 4
          %s382 = int_to_ptr.hbm [resolvable:$true] %s381
          %s383 = sshll.u32 [#allocation15], 4
          %s384 = int_to_ptr.vmem [resolvable:$true] %s383
          %389 = dma.hbm_to_vmem [thread:$0]  %s382, 256, %s384, [#allocation16], 64, 64, 4
        $region32: #{tpu_custom_call.1} parent=11 // pred_fallthru
          _
        // Predicated region
        $region33: #{tpu_custom_call.1} parent=11 // pred_check
          %p390 = pneg %p257
        $region34: #{tpu_custom_call.1} parent=11 // pred_check_branch
          %392 = sbr.rel (%p390) target = $region36
        $region35: #{tpu_custom_call.1} parent=11 // pred_region
          _
        $region36: #{tpu_custom_call.1} parent=11 // pred_fallthru
          _
        // Predicated region
        $region37: #{tpu_custom_call.1} parent=11 // pred_check
          %p393 = pneg %p278
        $region38: #{tpu_custom_call.1} parent=11 // pred_check_branch
          %395 = sbr.rel (%p393) target = $region40
        $region39: #{tpu_custom_call.1} parent=11 // pred_region
          %397 = vsyncadd [#allocation16], 0
          %s398 = sshll.u32 %s9, 4
          %s399 = int_to_ptr.hbm [resolvable:$true] %s398
          %s400 = sshll.u32 [#allocation17], 4
          %s401 = int_to_ptr.vmem [resolvable:$true] %s400
          %406 = dma.hbm_to_vmem [thread:$0]  %s399, 256, %s401, [#allocation16], 64, 64, 4
        $region40: #{tpu_custom_call.1} parent=11 // pred_fallthru
          _
        // Predicated region
        $region41: #{tpu_custom_call.1} parent=11 // pred_check
          %p407 = pneg %p299
        $region42: #{tpu_custom_call.1} parent=11 // pred_check_branch
          %409 = sbr.rel (%p407) target = $region44
        $region43: #{tpu_custom_call.1} parent=11 // pred_region
          _
        $region44: #{tpu_custom_call.1} parent=11 // pred_fallthru
          _
      $region12: #{tpu_custom_call.1} parent=5 // pred_fallthru
        _
      %p410 = scmp.lt.s32.totalorder %s28, 2
      // Predicated region
      $region45: #{tpu_custom_call.1} parent=5 // pred_check
        %p411 = pneg %p410
      $region46: #{tpu_custom_call.1} parent=5 // pred_check_branch
        %413 = sbr.rel (%p411) target = $region48
      $region47: #{tpu_custom_call.1} parent=5 // pred_region
        // Predicated region
        $region49: #{tpu_custom_call.1} parent=47 // pred_check
          %p414 = pneg %p69
        $region50: #{tpu_custom_call.1} parent=47 // pred_check_branch
          %416 = sbr.rel (%p414) target = $region52
        $region51: #{tpu_custom_call.1} parent=47 // pred_region
          %s417 = sand.u32 %s59, 1
          %s418 = scalar_lea.sflag [#allocation7], %s417
          %s419 = sand.u32 %s59, 1
          %s420 = smul.addr %s419, 4
          %s421 = scalar_lea.vmem [#allocation6], %s420
          %423 = vsyncadd %s418, 0
          %s424 = sadd.s32 %s36, %s35
          %s425 = smul.addr %s424, 4
          %s426 = scalar_lea.hbm %s0, %s425
          %s428 = sshll.u32 %s426, 4
          %s429 = int_to_ptr.hbm [resolvable:$true] %s428
          %s430 = sshll.u32 %s421, 4
          %s431 = int_to_ptr.vmem [resolvable:$true] %s430
          %433 = dma.hbm_to_vmem [thread:$0]  %s429, 64, %s431, %s418
        $region52: #{tpu_custom_call.1} parent=47 // pred_fallthru
          _
        // Predicated region
        $region53: #{tpu_custom_call.1} parent=47 // pred_check
          %p434 = pneg %p97
        $region54: #{tpu_custom_call.1} parent=47 // pred_check_branch
          %436 = sbr.rel (%p434) target = $region56
        $region55: #{tpu_custom_call.1} parent=47 // pred_region
          %s437 = sand.u32 %s28, 1
          %s438 = scalar_lea.sflag [#allocation10], %s437
          %s439 = sand.u32 %s87, 1
          %s440 = smul.addr %s439, 4
          %s441 = scalar_lea.vmem [#allocation9], %s440
          %443 = vsyncadd %s438, 0
          %s444 = sadd.s32 %s37, %s35
          %s445 = smul.addr %s444, 4
          %s446 = scalar_lea.hbm %s1, %s445
          %s448 = sshll.u32 %s446, 4
          %s449 = int_to_ptr.hbm [resolvable:$true] %s448
          %s450 = sshll.u32 %s441, 4
          %s451 = int_to_ptr.vmem [resolvable:$true] %s450
          %453 = dma.hbm_to_vmem [thread:$0]  %s449, 64, %s451, %s438
        $region56: #{tpu_custom_call.1} parent=47 // pred_fallthru
          _
        // Predicated region
        $region57: #{tpu_custom_call.1} parent=47 // pred_check
          %p454 = pneg %p125
        $region58: #{tpu_custom_call.1} parent=47 // pred_check_branch
          %456 = sbr.rel (%p454) target = $region60
        $region59: #{tpu_custom_call.1} parent=47 // pred_region
          %s457 = sand.u32 %s28, 1
          %s458 = scalar_lea.sflag [#allocation10], %s457
          %s459 = sand.u32 %s115, 1
          %s460 = smul.addr %s459, 4
          %s461 = scalar_lea.vmem [#allocation11], %s460
          %463 = vsyncadd %s458, 0
          %s464 = sadd.s32 %s37, %s35
          %s465 = smul.addr %s464, 4
          %s466 = scalar_lea.hbm %s2, %s465
          %s468 = sshll.u32 %s466, 4
          %s469 = int_to_ptr.hbm [resolvable:$true] %s468
          %s470 = sshll.u32 %s461, 4
          %s471 = int_to_ptr.vmem [resolvable:$true] %s470
          %473 = dma.hbm_to_vmem [thread:$0]  %s469, 64, %s471, %s458
        $region60: #{tpu_custom_call.1} parent=47 // pred_fallthru
          _
      $region48: #{tpu_custom_call.1} parent=5 // pred_fallthru
        _
      %p474 = scmp.le.s32.totalorder 1, %s28
      %p475 = scmp.lt.s32.totalorder %s28, 3
      %p476 = pnand %p474, %p475
      %p477 = pneg %p476
      // Predicated region
      $region61: #{tpu_custom_call.1} parent=5 // pred_check
        _
      $region62: #{tpu_custom_call.1} parent=5 // pred_check_branch
        %479 = sbr.rel (%p476) target = $region64
      $region63: #{tpu_custom_call.1} parent=5 // pred_region
        %s480 = ssub.s32 %s28, 1
        %s481 = sand.u32 %s62, 1
        %s482 = scalar_lea.sflag [#allocation7], %s481
        %s483 = sand.u32 %s62, 1
        %s484 = smul.addr %s483, 4
        %s485 = scalar_lea.vmem [#allocation6], %s484
        // Predicated region
        $region65: #{tpu_custom_call.1} parent=63 // pred_check
          %p486 = pneg %p75
        $region66: #{tpu_custom_call.1} parent=63 // pred_check_branch
          %488 = sbr.rel (%p486) target = $region68
        $region67: #{tpu_custom_call.1} parent=63 // pred_region
          %490 = dma.done %s482, 64
        $region68: #{tpu_custom_call.1} parent=63 // pred_fallthru
          _
        %s491 = sand.u32 %s33, 1
        %s492 = scalar_lea.sflag [#allocation10], %s491
        %s493 = sand.u32 %s90, 1
        %s494 = smul.addr %s493, 4
        %s495 = scalar_lea.vmem [#allocation9], %s494
        // Predicated region
        $region69: #{tpu_custom_call.1} parent=63 // pred_check
          %p496 = pneg %p103
        $region70: #{tpu_custom_call.1} parent=63 // pred_check_branch
          %498 = sbr.rel (%p496) target = $region72
        $region71: #{tpu_custom_call.1} parent=63 // pred_region
          %500 = dma.done %s492, 64
        $region72: #{tpu_custom_call.1} parent=63 // pred_fallthru
          _
        %s501 = sand.u32 %s33, 1
        %s502 = scalar_lea.sflag [#allocation10], %s501
        %s503 = sand.u32 %s118, 1
        %s504 = smul.addr %s503, 4
        %s505 = scalar_lea.vmem [#allocation11], %s504
        // Predicated region
        $region73: #{tpu_custom_call.1} parent=63 // pred_check
          %p506 = pneg %p131
        $region74: #{tpu_custom_call.1} parent=63 // pred_check_branch
          %508 = sbr.rel (%p506) target = $region76
        $region75: #{tpu_custom_call.1} parent=63 // pred_region
          %510 = dma.done %s502, 64
        $region76: #{tpu_custom_call.1} parent=63 // pred_fallthru
          _
        // Predicated region
        $region77: #{tpu_custom_call.1} parent=63 // pred_check
          %p511 = pneg %p152
        $region78: #{tpu_custom_call.1} parent=63 // pred_check_branch
          %513 = sbr.rel (%p511) target = $region80
        $region79: #{tpu_custom_call.1} parent=63 // pred_region
          %515 = dma.done [#allocation13], 256
        $region80: #{tpu_custom_call.1} parent=63 // pred_fallthru
          _
        // Predicated region
        $region81: #{tpu_custom_call.1} parent=63 // pred_check
          %p516 = pneg %p194
        $region82: #{tpu_custom_call.1} parent=63 // pred_check_branch
          %518 = sbr.rel (%p516) target = $region84
        $region83: #{tpu_custom_call.1} parent=63 // pred_region
          %520 = dma.done [#allocation13], 256
        $region84: #{tpu_custom_call.1} parent=63 // pred_fallthru
          _
        // Predicated region
        $region85: #{tpu_custom_call.1} parent=63 // pred_check
          %p521 = pneg %p236
        $region86: #{tpu_custom_call.1} parent=63 // pred_check_branch
          %523 = sbr.rel (%p521) target = $region88
        $region87: #{tpu_custom_call.1} parent=63 // pred_region
          %525 = dma.done [#allocation16], 256
        $region88: #{tpu_custom_call.1} parent=63 // pred_fallthru
          _
        // Predicated region
        $region89: #{tpu_custom_call.1} parent=63 // pred_check
          %p526 = pneg %p278
        $region90: #{tpu_custom_call.1} parent=63 // pred_check_branch
          %528 = sbr.rel (%p526) target = $region92
        $region91: #{tpu_custom_call.1} parent=63 // pred_region
          %530 = dma.done [#allocation16], 256
        $region92: #{tpu_custom_call.1} parent=63 // pred_fallthru
          _
        %s531 = sand.u32 %s62, 1
        %s532 = scalar_lea.sflag [#allocation7], %s531
        %s533 = sand.u32 %s62, 1
        %s534 = smul.addr %s533, 4
        %s535 = scalar_lea.vmem [#allocation6], %s534
        %p536 = pneg %p75
        %p537 = pneg %p72
        %s538 = sand.u32 %s33, 1
        %s539 = scalar_lea.sflag [#allocation10], %s538
        %s540 = sand.u32 %s90, 1
        %s541 = smul.addr %s540, 4
        %s542 = scalar_lea.vmem [#allocation9], %s541
        %p543 = pneg %p103
        %p544 = pneg %p100
        %s545 = sand.u32 %s33, 1
        %s546 = scalar_lea.sflag [#allocation10], %s545
        %s547 = sand.u32 %s118, 1
        %s548 = smul.addr %s547, 4
        %s549 = scalar_lea.vmem [#allocation11], %s548
        %p550 = pneg %p131
        %p551 = pneg %p128
        %p552 = pneg %p152
        %p553 = pneg %p149
        %p554 = pneg %p173
        %p555 = pneg %p170
        %p556 = pneg %p194
        %p557 = pneg %p191
        %p558 = pneg %p215
        %p559 = pneg %p212
        %p560 = pneg %p236
        %p561 = pneg %p233
        %p562 = pneg %p257
        %p563 = pneg %p254
        %p564 = pneg %p278
        %p565 = pneg %p275
        %p566 = pneg %p299
        %p567 = pneg %p296
        %p568 = pneg %p327
        %p569 = pneg %p324
        %s570 = sand.u32 %s314, 1
        %s571 = scalar_lea.sflag [#allocation8], %s570
        %s572 = sand.u32 %s314, 1
        %s573 = smul.addr %s572, 8
        %s574 = scalar_lea.vmem [#allocation18], %s573
        %p576 = scmp.eq.s32.totalorder %s40, 0
        // Predicated region
        $region93: #{tpu_custom_call.1} parent=63 // pred_check
          %p577 = pneg %p576
        $region94: #{tpu_custom_call.1} parent=63 // pred_check_branch
          %579 = sbr.rel (%p577) target = $region96
        $region95: #{tpu_custom_call.1} parent=63 // pred_region
          %v580 = vld [vmem:[%s485] sm:$0xf]
          %v581 = vld [vmem:[#allocation12] sm:$0xf]
          %v582 = vld [vmem:[#allocation12 + $0x4] sm:$0xf]
          %v583 = vld [vmem:[#allocation12 + $0x8] sm:$0xf]
          %v584 = vld [vmem:[#allocation12 + $0xc] sm:$0xf]
          %v585 = vld [vmem:[%s4] sm:$0x1]
          %v587 = vperm.slane %v585, 0
          %v593 = vunpack.c.l.b16 %v581
          %v594 = vunpack.c.l.b16 %v582
          %v595 = vunpack.c.l.b16 %v583
          %v596 = vunpack.c.l.b16 %v584
          %v597 = vpack.c.b16 %v594, %v593
          %v598 = vpack.c.b16 %v596, %v595
          %vm601 = vcmask 261120
          %v603 = vsel %vm601, %v580, 0
          %605 = vmatpush.bf16.msra.mxu0 0
          %606 = vmatpush.bf16.msra.mxu0 0
          %607 = vmatpush.bf16.msra.mxu0 0
          %608 = vmatpush.bf16.msra.mxu0 0
          %609 = vmatpush.bf16.msra.mxu0 0
          %610 = vmatpush.bf16.msra.mxu0 0
          %611 = vmatpush.bf16.msra.mxu0 %v598
          %612 = vmatpush.bf16.msra.mxu0 %v597
          %613 = vmatmul.bf16.gmra.mxu0 %v603
          %v614 = vpop.f32.mrf.mxu0
          %v615 = vadd.f32 %v587, %v614
          %v616 = vpop.f32.mrf.mxu0
          %617 = vdwg.mxu0
          %v618 = vmul.f32 %v615, 0.35355338
          %v619 = vpack.c.bf16 %v618, %v618
          %vm620 = vcmask 257024
          %621 = vst.msk [vmem:[#allocation2] sm:$0xf] %vm620, %v619
          %vm622 = vcmask 7168
          %623 = vst.msk [vmem:[#allocation3] sm:$0xff] %vm622, -inf
          %624 = vst.msk [vmem:[#allocation3 + $0x8] sm:$0xff] %vm622, -inf
          %625 = vst.msk [vmem:[#allocation3 + $0x10] sm:$0xff] %vm622, -inf
          %626 = vst.msk [vmem:[#allocation3 + $0x18] sm:$0xff] %vm622, -inf
          %627 = vst.msk [vmem:[#allocation4] sm:$0xff] %vm622, 0.0
          %628 = vst.msk [vmem:[#allocation4 + $0x8] sm:$0xff] %vm622, 0.0
          %629 = vst.msk [vmem:[#allocation4 + $0x10] sm:$0xff] %vm622, 0.0
          %630 = vst.msk [vmem:[#allocation4 + $0x18] sm:$0xff] %vm622, 0.0
          %vm631 = vcmask 64512
          %632 = vst.msk [vmem:[#allocation5] sm:$0xff] %vm631, 0.0
          %633 = vst.msk [vmem:[#allocation5 + $0x8] sm:$0xff] %vm631, 0.0
          %634 = vst.msk [vmem:[#allocation5 + $0x10] sm:$0xff] %vm631, 0.0
          %635 = vst.msk [vmem:[#allocation5 + $0x18] sm:$0xff] %vm631, 0.0
        $region96: #{tpu_custom_call.1} parent=63 // pred_fallthru
          _
        %v636 = vld [vmem:[%s495] sm:$0xf]
        %v637 = vld [vmem:[#allocation14] sm:$0xf]
        %v638 = vld [vmem:[#allocation14 + $0x4] sm:$0xf]
        %v639 = vld [vmem:[#allocation14 + $0x8] sm:$0xf]
        %v640 = vld [vmem:[#allocation14 + $0xc] sm:$0xf]
        %v641 = vld [vmem:[%s6] sm:$0x1]
        %v643 = vperm.slane %v641, 0
        %v649 = vunpack.c.l.b16 %v637
        %v650 = vunpack.c.l.b16 %v638
        %v651 = vunpack.c.l.b16 %v639
        %v652 = vunpack.c.l.b16 %v640
        %v653 = vpack.c.b16 %v650, %v649
        %v654 = vpack.c.b16 %v652, %v651
        %vm657 = vcmask 261120
        %v659 = vsel %vm657, %v636, 0
        %661 = vmatpush.bf16.msra.mxu0 0
        %662 = vmatpush.bf16.msra.mxu0 0
        %663 = vmatpush.bf16.msra.mxu0 0
        %664 = vmatpush.bf16.msra.mxu0 0
        %665 = vmatpush.bf16.msra.mxu0 0
        %666 = vmatpush.bf16.msra.mxu0 0
        %667 = vmatpush.bf16.msra.mxu0 %v654
        %668 = vmatpush.bf16.msra.mxu0 %v653
        %669 = vmatmul.bf16.gmra.mxu0 %v659
        %v670 = vpop.f32.mrf.mxu0
        %v671 = vadd.f32 %v643, %v670
        %v672 = vpop.f32.mrf.mxu0
        %673 = vdwg.mxu0
        %v674 = vpack.c.bf16 %v671, %v671
        %v675 = vld [vmem:[%s505] sm:$0xf]
        %v676 = vld [vmem:[#allocation15] sm:$0xf]
        %v677 = vld [vmem:[#allocation15 + $0x4] sm:$0xf]
        %v678 = vld [vmem:[#allocation15 + $0x8] sm:$0xf]
        %v679 = vld [vmem:[#allocation15 + $0xc] sm:$0xf]
        %v680 = vld [vmem:[%s8] sm:$0x1]
        %v682 = vperm.slane %v680, 0
        %v688 = vunpack.c.l.b16 %v676
        %v689 = vunpack.c.l.b16 %v677
        %v690 = vunpack.c.l.b16 %v678
        %v691 = vunpack.c.l.b16 %v679
        %v692 = vpack.c.b16 %v689, %v688
        %v693 = vpack.c.b16 %v691, %v690
        %v697 = vsel %vm657, %v675, 0
        %699 = vmatpush.bf16.msra.mxu0 0
        %700 = vmatpush.bf16.msra.mxu0 0
        %701 = vmatpush.bf16.msra.mxu0 0
        %702 = vmatpush.bf16.msra.mxu0 0
        %703 = vmatpush.bf16.msra.mxu0 0
        %704 = vmatpush.bf16.msra.mxu0 0
        %705 = vmatpush.bf16.msra.mxu0 %v693
        %706 = vmatpush.bf16.msra.mxu0 %v692
        %707 = vmatmul.bf16.gmra.mxu0 %v697
        %v708 = vpop.f32.mrf.mxu0
        %v709 = vadd.f32 %v682, %v708
        %v710 = vpop.f32.mrf.mxu0
        %711 = vdwg.mxu0
        %v712 = vpack.c.bf16 %v709, %v709
        %v713 = vld [vmem:[#allocation2] sm:$0xf]
        %715 = vrot.lane.b32.xlu0 %v713, 120
        %v716 = vpop.permute.xlu0 %715
        %717 = vrot.lane.b32.xlu0 %v713, 112
        %v718 = vpop.permute.xlu0 %717
        %719 = vrot.lane.b32.xlu0 %v713, 104
        %v720 = vpop.permute.xlu0 %719
        %722 = vrot.lane.b32.xlu0 %v674, 120
        %v723 = vpop.permute.xlu0 %722
        %724 = vrot.lane.b32.xlu0 %v674, 112
        %v725 = vpop.permute.xlu0 %724
        %726 = vrot.lane.b32.xlu0 %v674, 104
        %v727 = vpop.permute.xlu0 %726
        %729 = vrot.lane.b32.xlu0 %v712, 120
        %v730 = vpop.permute.xlu0 %729
        %731 = vrot.lane.b32.xlu0 %v712, 112
        %v732 = vpop.permute.xlu0 %731
        %733 = vrot.lane.b32.xlu0 %v712, 104
        %v734 = vpop.permute.xlu0 %733
        %vm735 = vcmask 64512
        %v737 = vsel %vm735, %v713, 0
        %v740 = vsel %vm735, %v674, 0
        %742 = vmatpush.bf16.xpose.msra.mxu0 0
        %743 = vmatpush.bf16.xpose.msra.mxu0 0
        %744 = vmatpush.bf16.xpose.msra.mxu0 0
        %745 = vmatpush.bf16.xpose.msra.mxu0 0
        %746 = vmatpush.bf16.xpose.msra.mxu0 0
        %747 = vmatpush.bf16.xpose.msra.mxu0 0
        %748 = vmatpush.bf16.xpose.msra.mxu0 0
        %749 = vmatpush.bf16.xpose.msra.mxu0 %v740
        %750 = vmatmul.bf16.gmra.mxu0 %v737
        %v751 = vpop.f32.mrf.mxu0
        %v752 = vadd.f32 0.0, %v751
        %v753 = vpop.f32.mrf.mxu0
        %754 = vdwg.mxu0
        %v756 = vsel %vm735, %v716, 0
        %v759 = vsel %vm735, %v723, 0
        %761 = vmatpush.bf16.xpose.msra.mxu0 0
        %762 = vmatpush.bf16.xpose.msra.mxu0 0
        %763 = vmatpush.bf16.xpose.msra.mxu0 0
        %764 = vmatpush.bf16.xpose.msra.mxu0 0
        %765 = vmatpush.bf16.xpose.msra.mxu0 0
        %766 = vmatpush.bf16.xpose.msra.mxu0 0
        %767 = vmatpush.bf16.xpose.msra.mxu0 0
        %768 = vmatpush.bf16.xpose.msra.mxu0 %v759
        %769 = vmatmul.bf16.gmra.mxu0 %v756
        %v770 = vpop.f32.mrf.mxu0
        %v771 = vadd.f32 0.0, %v770
        %v772 = vpop.f32.mrf.mxu0
        %773 = vdwg.mxu0
        %v775 = vsel %vm735, %v718, 0
        %v778 = vsel %vm735, %v725, 0
        %780 = vmatpush.bf16.xpose.msra.mxu0 0
        %781 = vmatpush.bf16.xpose.msra.mxu0 0
        %782 = vmatpush.bf16.xpose.msra.mxu0 0
        %783 = vmatpush.bf16.xpose.msra.mxu0 0
        %784 = vmatpush.bf16.xpose.msra.mxu0 0
        %785 = vmatpush.bf16.xpose.msra.mxu0 0
        %786 = vmatpush.bf16.xpose.msra.mxu0 0
        %787 = vmatpush.bf16.xpose.msra.mxu0 %v778
        %788 = vmatmul.bf16.gmra.mxu0 %v775
        %v789 = vpop.f32.mrf.mxu0
        %v790 = vadd.f32 0.0, %v789
        %v791 = vpop.f32.mrf.mxu0
        %792 = vdwg.mxu0
        %v794 = vsel %vm735, %v720, 0
        %v797 = vsel %vm735, %v727, 0
        %799 = vmatpush.bf16.xpose.msra.mxu0 0
        %800 = vmatpush.bf16.xpose.msra.mxu0 0
        %801 = vmatpush.bf16.xpose.msra.mxu0 0
        %802 = vmatpush.bf16.xpose.msra.mxu0 0
        %803 = vmatpush.bf16.xpose.msra.mxu0 0
        %804 = vmatpush.bf16.xpose.msra.mxu0 0
        %805 = vmatpush.bf16.xpose.msra.mxu0 0
        %806 = vmatpush.bf16.xpose.msra.mxu0 %v797
        %807 = vmatmul.bf16.gmra.mxu0 %v794
        %v808 = vpop.f32.mrf.mxu0
        %v809 = vadd.f32 0.0, %v808
        %v810 = vpop.f32.mrf.mxu0
        %811 = vdwg.mxu0
        %v812 = vld [vmem:[#allocation3] sm:$0xff]
        %v813 = vld [vmem:[#allocation3 + $0x8] sm:$0xff]
        %v814 = vld [vmem:[#allocation3 + $0x10] sm:$0xff]
        %v815 = vld [vmem:[#allocation3 + $0x18] sm:$0xff]
        %v816 = vsel %vm735, %v752, -inf
        %817 = vmax.xlane.f32.xlu0 %v816
        %v818 = vpop.xlane.xlu0 %817
        %v819 = vsel %vm735, %v771, -inf
        %820 = vmax.xlane.f32.xlu0 %v819
        %v821 = vpop.xlane.xlu0 %820
        %v822 = vsel %vm735, %v790, -inf
        %823 = vmax.xlane.f32.xlu0 %v822
        %v824 = vpop.xlane.xlu0 %823
        %v825 = vsel %vm735, %v809, -inf
        %826 = vmax.xlane.f32.xlu0 %v825
        %v827 = vpop.xlane.xlu0 %826
        %v828 = vmax.f32 %v812, %v818
        %v829 = vmax.f32 %v813, %v821
        %v830 = vmax.f32 %v814, %v824
        %v831 = vmax.f32 %v815, %v827
        %v832 = vsub.f32 %v812, %v828
        %v833 = vsub.f32 %v813, %v829
        %v834 = vsub.f32 %v814, %v830
        %v835 = vsub.f32 %v815, %v831
        %v836 = vmul.f32 %v832, 1.442695
        %v837 = vpow.pop %v836
        %v838 = vmul.f32 %v833, 1.442695
        %v839 = vpow.pop %v838
        %v840 = vmul.f32 %v834, 1.442695
        %v841 = vpow.pop %v840
        %v842 = vmul.f32 %v835, 1.442695
        %v843 = vpow.pop %v842
        %845 = vset.pattern.permute.xlu0 0
        %846 = vperm.xlu0 %845, %v828
        %v847 = vpop.permute.xlu0 %846
        %850 = vset.pattern.permute.xlu0 0
        %851 = vperm.xlu0 %850, %v829
        %v852 = vpop.permute.xlu0 %851
        %855 = vset.pattern.permute.xlu0 0
        %856 = vperm.xlu0 %855, %v830
        %v857 = vpop.permute.xlu0 %856
        %860 = vset.pattern.permute.xlu0 0
        %861 = vperm.xlu0 %860, %v831
        %v862 = vpop.permute.xlu0 %861
        %v864 = vsub.f32 %v752, %v847
        %v865 = vsub.f32 %v771, %v852
        %v866 = vsub.f32 %v790, %v857
        %v867 = vsub.f32 %v809, %v862
        %v868 = vmul.f32 %v864, 1.442695
        %v869 = vpow.pop %v868
        %v870 = vmul.f32 %v865, 1.442695
        %v871 = vpow.pop %v870
        %v872 = vmul.f32 %v866, 1.442695
        %v873 = vpow.pop %v872
        %v874 = vmul.f32 %v867, 1.442695
        %v875 = vpow.pop %v874
        %v876 = vld [vmem:[#allocation4] sm:$0xff]
        %v877 = vld [vmem:[#allocation4 + $0x8] sm:$0xff]
        %v878 = vld [vmem:[#allocation4 + $0x10] sm:$0xff]
        %v879 = vld [vmem:[#allocation4 + $0x18] sm:$0xff]
        %v880 = vmul.f32 %v837, %v876
        %v881 = vmul.f32 %v839, %v877
        %v882 = vmul.f32 %v841, %v878
        %v883 = vmul.f32 %v843, %v879
        %v884 = vsel %vm735, %v869, 0.0
        %885 = vadd.xlane.f32.xlu0 %v884
        %v886 = vpop.xlane.xlu0 %885
        %v887 = vsel %vm735, %v871, 0.0
        %888 = vadd.xlane.f32.xlu0 %v887
        %v889 = vpop.xlane.xlu0 %888
        %v890 = vsel %vm735, %v873, 0.0
        %891 = vadd.xlane.f32.xlu0 %v890
        %v892 = vpop.xlane.xlu0 %891
        %v893 = vsel %vm735, %v875, 0.0
        %894 = vadd.xlane.f32.xlu0 %v893
        %v895 = vpop.xlane.xlu0 %894
        %v896 = vadd.f32 %v880, %v886
        %v897 = vadd.f32 %v881, %v889
        %v898 = vadd.f32 %v882, %v892
        %v899 = vadd.f32 %v883, %v895
        %vm900 = vcmask 7168
        %901 = vst.msk [vmem:[#allocation4] sm:$0xff] %vm900, %v896
        %902 = vst.msk [vmem:[#allocation4 + $0x8] sm:$0xff] %vm900, %v897
        %903 = vst.msk [vmem:[#allocation4 + $0x10] sm:$0xff] %vm900, %v898
        %904 = vst.msk [vmem:[#allocation4 + $0x18] sm:$0xff] %vm900, %v899
        %v905 = vpack.c.bf16 %v869, %v869
        %v906 = vpack.c.bf16 %v871, %v871
        %v907 = vpack.c.bf16 %v873, %v873
        %v908 = vpack.c.bf16 %v875, %v875
        %v910 = vsel %vm735, %v905, 0
        %vm912 = vcmask 1043456
        %v914 = vsel %vm912, %v712, 0
        %916 = vmatpush.bf16.msra.mxu0 0
        %917 = vmatpush.bf16.msra.mxu0 0
        %918 = vmatpush.bf16.msra.mxu0 0
        %919 = vmatpush.bf16.msra.mxu0 0
        %920 = vmatpush.bf16.msra.mxu0 0
        %921 = vmatpush.bf16.msra.mxu0 0
        %922 = vmatpush.bf16.msra.mxu0 0
        %923 = vmatpush.bf16.msra.mxu0 %v914
        %924 = vmatmul.bf16.gmra.mxu0 %v910
        %v925 = vpop.f32.mrf.mxu0
        %v926 = vadd.f32 0.0, %v925
        %v927 = vpop.f32.mrf.mxu0
        %928 = vdwg.mxu0
        %v930 = vsel %vm735, %v906, 0
        %v933 = vsel %vm912, %v730, 0
        %935 = vmatpush.bf16.msra.mxu0 0
        %936 = vmatpush.bf16.msra.mxu0 0
        %937 = vmatpush.bf16.msra.mxu0 0
        %938 = vmatpush.bf16.msra.mxu0 0
        %939 = vmatpush.bf16.msra.mxu0 0
        %940 = vmatpush.bf16.msra.mxu0 0
        %941 = vmatpush.bf16.msra.mxu0 0
        %942 = vmatpush.bf16.msra.mxu0 %v933
        %943 = vmatmul.bf16.gmra.mxu0 %v930
        %v944 = vpop.f32.mrf.mxu0
        %v945 = vadd.f32 0.0, %v944
        %v946 = vpop.f32.mrf.mxu0
        %947 = vdwg.mxu0
        %v949 = vsel %vm735, %v907, 0
        %v952 = vsel %vm912, %v732, 0
        %954 = vmatpush.bf16.msra.mxu0 0
        %955 = vmatpush.bf16.msra.mxu0 0
        %956 = vmatpush.bf16.msra.mxu0 0
        %957 = vmatpush.bf16.msra.mxu0 0
        %958 = vmatpush.bf16.msra.mxu0 0
        %959 = vmatpush.bf16.msra.mxu0 0
        %960 = vmatpush.bf16.msra.mxu0 0
        %961 = vmatpush.bf16.msra.mxu0 %v952
        %962 = vmatmul.bf16.gmra.mxu0 %v949
        %v963 = vpop.f32.mrf.mxu0
        %v964 = vadd.f32 0.0, %v963
        %v965 = vpop.f32.mrf.mxu0
        %966 = vdwg.mxu0
        %v968 = vsel %vm735, %v908, 0
        %v971 = vsel %vm912, %v734, 0
        %973 = vmatpush.bf16.msra.mxu0 0
        %974 = vmatpush.bf16.msra.mxu0 0
        %975 = vmatpush.bf16.msra.mxu0 0
        %976 = vmatpush.bf16.msra.mxu0 0
        %977 = vmatpush.bf16.msra.mxu0 0
        %978 = vmatpush.bf16.msra.mxu0 0
        %979 = vmatpush.bf16.msra.mxu0 0
        %980 = vmatpush.bf16.msra.mxu0 %v971
        %981 = vmatmul.bf16.gmra.mxu0 %v968
        %v982 = vpop.f32.mrf.mxu0
        %v983 = vadd.f32 0.0, %v982
        %v984 = vpop.f32.mrf.mxu0
        %985 = vdwg.mxu0
        %v986 = vld [vmem:[#allocation5] sm:$0xff]
        %v987 = vld [vmem:[#allocation5 + $0x8] sm:$0xff]
        %v988 = vld [vmem:[#allocation5 + $0x10] sm:$0xff]
        %v989 = vld [vmem:[#allocation5 + $0x18] sm:$0xff]
        %991 = vset.pattern.permute.xlu0 0
        %992 = vperm.xlu0 %991, %v837
        %v993 = vpop.permute.xlu0 %992
        %996 = vset.pattern.permute.xlu0 0
        %997 = vperm.xlu0 %996, %v839
        %v998 = vpop.permute.xlu0 %997
        %1001 = vset.pattern.permute.xlu0 0
        %1002 = vperm.xlu0 %1001, %v841
        %v1003 = vpop.permute.xlu0 %1002
        %1006 = vset.pattern.permute.xlu0 0
        %1007 = vperm.xlu0 %1006, %v843
        %v1008 = vpop.permute.xlu0 %1007
        %v1010 = vmul.f32 %v993, %v986
        %v1011 = vmul.f32 %v998, %v987
        %v1012 = vmul.f32 %v1003, %v988
        %v1013 = vmul.f32 %v1008, %v989
        %v1014 = vadd.f32 %v1010, %v926
        %v1015 = vadd.f32 %v1011, %v945
        %v1016 = vadd.f32 %v1012, %v964
        %v1017 = vadd.f32 %v1013, %v983
        %1018 = vst.msk [vmem:[#allocation5] sm:$0xff] %vm735, %v1014
        %1019 = vst.msk [vmem:[#allocation5 + $0x8] sm:$0xff] %vm735, %v1015
        %1020 = vst.msk [vmem:[#allocation5 + $0x10] sm:$0xff] %vm735, %v1016
        %1021 = vst.msk [vmem:[#allocation5 + $0x18] sm:$0xff] %vm735, %v1017
        %1022 = vst.msk [vmem:[#allocation3] sm:$0xff] %vm900, %v828
        %1023 = vst.msk [vmem:[#allocation3 + $0x8] sm:$0xff] %vm900, %v829
        %1024 = vst.msk [vmem:[#allocation3 + $0x10] sm:$0xff] %vm900, %v830
        %1025 = vst.msk [vmem:[#allocation3 + $0x18] sm:$0xff] %vm900, %v831
        // Predicated region
        $region97: #{tpu_custom_call.1} parent=63 // pred_check
          %p1026 = pneg %p576
        $region98: #{tpu_custom_call.1} parent=63 // pred_check_branch
          %1028 = sbr.rel (%p1026) target = $region100
        $region99: #{tpu_custom_call.1} parent=63 // pred_region
          %v1029 = vld [vmem:[#allocation5] sm:$0xff]
          %v1030 = vld [vmem:[#allocation5 + $0x8] sm:$0xff]
          %v1031 = vld [vmem:[#allocation5 + $0x10] sm:$0xff]
          %v1032 = vld [vmem:[#allocation5 + $0x18] sm:$0xff]
          %v1033 = vld [vmem:[#allocation4] sm:$0xff]
          %v1034 = vld [vmem:[#allocation4 + $0x8] sm:$0xff]
          %v1035 = vld [vmem:[#allocation4 + $0x10] sm:$0xff]
          %v1036 = vld [vmem:[#allocation4 + $0x18] sm:$0xff]
          %v1037 = vrcp.pop %v1033
          %v1038 = vrcp.pop %v1034
          %v1039 = vrcp.pop %v1035
          %v1040 = vrcp.pop %v1036
          %1042 = vset.pattern.permute.xlu0 0
          %1043 = vperm.xlu0 %1042, %v1037
          %v1044 = vpop.permute.xlu0 %1043
          %1047 = vset.pattern.permute.xlu0 0
          %1048 = vperm.xlu0 %1047, %v1038
          %v1049 = vpop.permute.xlu0 %1048
          %1052 = vset.pattern.permute.xlu0 0
          %1053 = vperm.xlu0 %1052, %v1039
          %v1054 = vpop.permute.xlu0 %1053
          %1057 = vset.pattern.permute.xlu0 0
          %1058 = vperm.xlu0 %1057, %v1040
          %v1059 = vpop.permute.xlu0 %1058
          %v1061 = vmul.f32 %v1029, %v1044
          %v1062 = vmul.f32 %v1030, %v1049
          %v1063 = vmul.f32 %v1031, %v1054
          %v1064 = vmul.f32 %v1032, %v1059
          %1066 = vrot.lane.b32.xlu0 %v1062, 8
          %v1067 = vpop.permute.xlu0 %1066
          %1070 = vrot.lane.b32.xlu0 %v1063, 16
          %v1071 = vpop.permute.xlu0 %1070
          %1074 = vrot.lane.b32.xlu0 %v1064, 24
          %v1075 = vpop.permute.xlu0 %1074
          %v1077 = vsel %vm735, %v1061, %v1067
          %vm1078 = vcmask 130048
          %v1079 = vsel %vm1078, %v1077, %v1071
          %vm1080 = vcmask 195584
          %v1081 = vsel %vm1080, %v1079, %v1075
          %v1082 = vpack.c.bf16 %v1081, %v1081
          %v1083 = vld [vmem:[#allocation17] sm:$0xf]
          %v1084 = vld [vmem:[#allocation17 + $0x4] sm:$0xf]
          %v1085 = vld [vmem:[#allocation17 + $0x8] sm:$0xf]
          %v1086 = vld [vmem:[#allocation17 + $0xc] sm:$0xf]
          %v1087 = vld [vmem:[%s10] sm:$0x1]
          %v1089 = vperm.slane %v1087, 0
          %v1095 = vunpack.c.l.b16 %v1083
          %v1096 = vunpack.c.l.b16 %v1084
          %v1097 = vunpack.c.l.b16 %v1085
          %v1098 = vunpack.c.l.b16 %v1086
          %v1099 = vpack.c.b16 %v1096, %v1095
          %v1100 = vpack.c.b16 %v1098, %v1097
          %v1104 = vsel %vm657, %v1082, 0
          %1106 = vmatpush.bf16.msra.mxu0 0
          %1107 = vmatpush.bf16.msra.mxu0 0
          %1108 = vmatpush.bf16.msra.mxu0 0
          %1109 = vmatpush.bf16.msra.mxu0 0
          %1110 = vmatpush.bf16.msra.mxu0 0
          %1111 = vmatpush.bf16.msra.mxu0 0
          %1112 = vmatpush.bf16.msra.mxu0 %v1100
          %1113 = vmatpush.bf16.msra.mxu0 %v1099
          %1114 = vmatmul.bf16.gmra.mxu0 %v1104
          %v1115 = vpop.f32.mrf.mxu0
          %v1116 = vadd.f32 %v1089, %v1115
          %v1117 = vpop.f32.mrf.mxu0
          %1118 = vdwg.mxu0
          %1119 = vst.msk [vmem:[%s574] sm:$0xff] %vm657, %v1116
        $region100: #{tpu_custom_call.1} parent=63 // pred_fallthru
          _
        %s1120 = sand.u32 %s314, 1
        %s1121 = scalar_lea.sflag [#allocation8], %s1120
        %s1122 = sand.u32 %s314, 1
        %s1123 = smul.addr %s1122, 8
        %s1124 = scalar_lea.vmem [#allocation18], %s1123
        // Predicated region
        $region101: #{tpu_custom_call.1} parent=63 // pred_check
          %p1125 = pneg %p324
        $region102: #{tpu_custom_call.1} parent=63 // pred_check_branch
          %1127 = sbr.rel (%p1125) target = $region104
        $region103: #{tpu_custom_call.1} parent=63 // pred_region
          %1129 = vsyncadd %s1121, 0
          %s1130 = sadd.s32 %s39, %s38
          %s1131 = smul.addr %s1130, 8
          %s1132 = scalar_lea.hbm %s11, %s1131
          %s1134 = sshll.u32 %s1124, 4
          %s1135 = int_to_ptr.vmem [resolvable:$true] %s1134
          %s1136 = sshll.u32 %s1132, 4
          %s1137 = int_to_ptr.hbm [resolvable:$true] %s1136
          %1139 = dma.vmem_to_hbm [thread:$0]  %s1135, 128, %s1137, %s1121
        $region104: #{tpu_custom_call.1} parent=63 // pred_fallthru
          _
      $region64: #{tpu_custom_call.1} parent=5 // pred_fallthru
        _
      %p1140 = scmp.le.s32.totalorder 2, %s28
      // Predicated region
      $region105: #{tpu_custom_call.1} parent=5 // pred_check
        %p1141 = pneg %p1140
      $region106: #{tpu_custom_call.1} parent=5 // pred_check_branch
        %1143 = sbr.rel (%p1141) target = $region108
      $region107: #{tpu_custom_call.1} parent=5 // pred_region
        %s1144 = ssub.s32 %s28, 2
        // Predicated region
        $region109: #{tpu_custom_call.1} parent=107 // pred_check
          %p1145 = pneg %p330
        $region110: #{tpu_custom_call.1} parent=107 // pred_check_branch
          %1147 = sbr.rel (%p1145) target = $region112
        $region111: #{tpu_custom_call.1} parent=107 // pred_region
          %s1148 = sand.u32 %s315, 1
          %s1149 = scalar_lea.sflag [#allocation8], %s1148
          %s1150 = sand.u32 %s315, 1
          %s1151 = smul.addr %s1150, 8
          %s1152 = scalar_lea.vmem [#allocation18], %s1151
          %1154 = dma.done %s1149, 128
        $region112: #{tpu_custom_call.1} parent=107 // pred_fallthru
          _
      $region108: #{tpu_custom_call.1} parent=5 // pred_fallthru
        _
    $region6: #{tpu_custom_call.1} parent=1 // loop_footer
      %s32 = sadd.s32 1, %s28
    $region7: #{tpu_custom_call.1} parent=1 // loop_footer_branch
      %27 = sbr.rel target = $region3
    $region8: #{tpu_custom_call.1} parent=1 // loop_exit
      _
    %1155 = vsyncpa [#allocation7], 1
    %s1156 = scalar_lea.sflag [#allocation7], 1
    %1157 = vsyncpa %s1156, 1
    %1158 = vsyncpa [#allocation10], 1
    %s1159 = scalar_lea.sflag [#allocation10], 1
    %1160 = vsyncpa %s1159, 1
    %1161 = vsyncpa [#allocation13], 1
    %1162 = vsyncpa [#allocation16], 1
    %1163 = vsyncpa [#allocation8], 1
    %s1164 = scalar_lea.sflag [#allocation8], 1
    %1165 = vsyncpa %s1164, 1

</llo_original>
